<compile_context>
chip_gen: v7x
topology: tpu7x:2x2x1
jax: 0.10.0
libtpu: 0.0.40
codegen_flags: <defaults>
</compile_context>

<pallas_src>
import functools

import jax
import jax.numpy as jnp
from jax.experimental import pallas as pl
from jax.experimental.pallas import tpu as pltpu


LANE = 128
SUBLANE_BF16 = 16   # bf16 packs 16 rows per (16,128) vreg tile


def _round_up(x, m):
    return (x + m - 1) // m * m


def _pad2(a, rows, cols):
    r, c = a.shape
    return jnp.pad(a, ((0, rows - r), (0, cols - c)))


def _vmem_spec():
    return pl.BlockSpec(memory_space=pltpu.MemorySpace.VMEM)


_COMPILER_PARAMS = pltpu.CompilerParams(vmem_limit_bytes=32 * 1024 * 1024)


# ----------------------------------------------------------------------------
# Shared in-kernel bodies (traced inside the Pallas kernels below)
# ----------------------------------------------------------------------------

def _vision_body(obs, cur, txt, w_obs, b_obs, w_cur, b_cur,
                 w_film, b_film, w_fuse_obs, w_fuse_cur, b_fuse):
    # Branch projections: bf16 operands -> f32 MXU accumulation, f32 epilogue.
    obs_feat = jnp.maximum(
        jnp.dot(obs, w_obs, preferred_element_type=jnp.float32) + b_obs, 0.0)
    cur_feat = jnp.maximum(
        jnp.dot(cur, w_cur, preferred_element_type=jnp.float32) + b_cur, 0.0)

    # Single [t_pad, 2*e_pad] FiLM matmul fills the 256-wide MXU (v6e/v7x);
    # split at the lane-128 boundary: static, vreg-aligned, free.
    gb = jnp.dot(txt, w_film, preferred_element_type=jnp.float32) + b_film
    e_pad = gb.shape[1] // 2
    gamma = gb[:, :e_pad]
    beta = gb[:, e_pad:]

    # FiLM modulation: f32 VPU elementwise (v5e-safe; no bf16 VALU there).
    obs_mod = obs_feat * (1.0 + gamma) + beta

    # concat([obs_mod, cur_feat]) @ w_fuse expressed as two dots against the
    # static halves, accumulated in one expression (v7x MRB-friendly).
    fused = (jnp.dot(obs_mod.astype(jnp.bfloat16), w_fuse_obs,
                     preferred_element_type=jnp.float32)
             + jnp.dot(cur_feat.astype(jnp.bfloat16), w_fuse_cur,
                       preferred_element_type=jnp.float32)
             + b_fuse)
    return jnp.maximum(fused, 0.0)


def _dist_body(x_bf16, w1, b1, w2, b2, w3, b3):
    # Whole DenseNetwork MLP fused; hidden activations never leave vregs.
    h = jnp.maximum(
        jnp.dot(x_bf16, w1, preferred_element_type=jnp.float32) + b1, 0.0)
    h = jnp.maximum(
        jnp.dot(h.astype(jnp.bfloat16), w2,
                preferred_element_type=jnp.float32) + b2, 0.0)
    return jnp.dot(h.astype(jnp.bfloat16), w3,
                   preferred_element_type=jnp.float32) + b3


# ----------------------------------------------------------------------------
# Fused Pallas kernels (one pallas_call per sub-network + fused chain)
# ----------------------------------------------------------------------------

def _vision_kernel(obs_ref, cur_ref, txt_ref,
                   w_obs_ref, b_obs_ref, w_cur_ref, b_cur_ref,
                   w_film_ref, b_film_ref,
                   w_fuse_obs_ref, w_fuse_cur_ref, b_fuse_ref,
                   o_ref):
    o_ref[...] = _vision_body(
        obs_ref[...], cur_ref[...], txt_ref[...],
        w_obs_ref[...], b_obs_ref[...], w_cur_ref[...], b_cur_ref[...],
        w_film_ref[...], b_film_ref[...],
        w_fuse_obs_ref[...], w_fuse_cur_ref[...], b_fuse_ref[...],
    ).astype(o_ref.dtype)


def _dist_kernel(x_ref, w1_ref, b1_ref, w2_ref, b2_ref, w3_ref, b3_ref, o_ref):
    o_ref[...] = _dist_body(
        x_ref[...], w1_ref[...], b1_ref[...], w2_ref[...], b2_ref[...],
        w3_ref[...], b3_ref[...],
    ).astype(o_ref.dtype)


def _vision_dist_kernel(obs_ref, cur_ref, txt_ref,
                        w_obs_ref, b_obs_ref, w_cur_ref, b_cur_ref,
                        w_film_ref, b_film_ref,
                        w_fuse_obs_ref, w_fuse_cur_ref, b_fuse_ref,
                        w1_ref, b1_ref, w2_ref, b2_ref, w3_ref, b3_ref,
                        cond_ref, dist_ref):
    # Vision encoder + distance MLP fused: the conditioning embedding never
    # leaves VMEM/vregs between the two stages (no HBM round trip, no second
    # kernel launch, no slice->re-pad->cast glue).
    cond = _vision_body(
        obs_ref[...], cur_ref[...], txt_ref[...],
        w_obs_ref[...], b_obs_ref[...], w_cur_ref[...], b_cur_ref[...],
        w_film_ref[...], b_film_ref[...],
        w_fuse_obs_ref[...], w_fuse_cur_ref[...], b_fuse_ref[...])
    cond_ref[...] = cond.astype(cond_ref.dtype)
    dist_ref[...] = _dist_body(
        cond.astype(jnp.bfloat16),
        w1_ref[...], b1_ref[...], w2_ref[...], b2_ref[...],
        w3_ref[...], b3_ref[...],
    ).astype(dist_ref.dtype)


def _text_kernel(ids_ref, tok_emb_ref, w_txt_ref, b_txt_ref, o_ref, *, seq_len):
    # In-kernel token "gather": one-hot counts matmul'd against the
    # VMEM-resident embedding table.  Counts are exact small integers in bf16;
    # the 1/T mean-pool is applied to the f32 pooled result (exact for any T).
    # TODO(synk): at real vocab sizes replace with a scalar-prefetch DMA gather.
    ids = ids_ref[...]                                    # [B_pad, T] int32
    bpad = ids.shape[0]
    vpad = tok_emb_ref.shape[0]
    v_iota = jax.lax.broadcasted_iota(jnp.int32, (bpad, vpad), 1)
    counts = jnp.zeros((bpad, vpad), jnp.float32)
    for t in range(seq_len):                              # tiny static unroll
        counts = counts + (ids[:, t:t + 1] == v_iota).astype(jnp.float32)

    pooled = jnp.dot(counts.astype(jnp.bfloat16), tok_emb_ref[...],
                     preferred_element_type=jnp.float32) * (1.0 / seq_len)
    out = (jnp.dot(pooled.astype(jnp.bfloat16), w_txt_ref[...],
                   preferred_element_type=jnp.float32) + b_txt_ref[...])
    o_ref[...] = out.astype(o_ref.dtype)


# ----------------------------------------------------------------------------
# LeLaN_clip_temp equivalent (dispatcher over the three sub-networks)
# ----------------------------------------------------------------------------

class LeLaNClipTempPallas:
    """JAX/Pallas equivalent of LeLaN_clip_temp.forward(func_name, **kwargs)."""

    def __init__(self, key, *, img_c=3, img_hw=16, text_dim=32,
                 embed_dim=32, vocab=64, token_dim=32):
        self.embed_dim = embed_dim
        self.text_dim = text_dim
        img_feat = img_c * img_hw * img_hw
        self.img_feat = img_feat

        # Lane-dense padded dims (multiples of 128).
        self.k_pad = _round_up(img_feat, LANE)
        self.e_pad = _round_up(embed_dim, LANE)
        self.t_pad = _round_up(text_dim, LANE)
        self.v_pad = _round_up(vocab, LANE)
        self.d_pad = _round_up(token_dim, LANE)
        h1, h2 = max(embed_dim // 4, 1), max(embed_dim // 16, 1)
        self.h1_pad = _round_up(h1, LANE)
        self.h2_pad = _round_up(h2, LANE)
        self.o_pad = LANE  # scalar distance padded to a full lane tile

        ks = jax.random.split(key, 12)

        def w(k, shape, scale=0.02):
            return (scale * jax.random.normal(k, shape)).astype(jnp.float32)

        def pad_w(a, rows, cols):
            # zero-padded + bf16 matmul operand (zero pads are numerically inert)
            return _pad2(a, rows, cols).astype(jnp.bfloat16)

        def zeros_b(cols):
            return jnp.zeros((1, cols), jnp.float32)

        # vision_encoder params (obs branch, current-img branch, FiLM, fuse head)
        # TODO(synk): the real vision_encoder is a CLIP visual backbone + FiLM;
        # replaced here by linear projections with the same interface.
        self.w_obs = pad_w(w(ks[0], (img_feat, embed_dim)), self.k_pad, self.e_pad)
        self.b_obs = zeros_b(self.e_pad)
        self.w_cur = pad_w(w(ks[1], (img_feat, embed_dim)), self.k_pad, self.e_pad)
        self.b_cur = zeros_b(self.e_pad)
        # FiLM gamma|beta as ONE [t_pad, 2*e_pad] weight (fills 256-wide MXU).
        w_film = w(ks[2], (text_dim, 2 * embed_dim))
        self.w_film = jnp.concatenate(
            [pad_w(w_film[:, :embed_dim], self.t_pad, self.e_pad),
             pad_w(w_film[:, embed_dim:], self.t_pad, self.e_pad)], axis=1)
        self.b_film = zeros_b(2 * self.e_pad)
        w_fuse = w(ks[3], (2 * embed_dim, embed_dim))
        self.w_fuse_obs = pad_w(w_fuse[:embed_dim], self.e_pad, self.e_pad)
        self.w_fuse_cur = pad_w(w_fuse[embed_dim:], self.e_pad, self.e_pad)
        self.b_fuse = zeros_b(self.e_pad)

        # text_encoder params (token embedding + pooled projection)
        # TODO(synk): the real text_encoder is CLIP's transformer encode_text
        # (EOT-token pooling); replaced by embedding + mean-pool + projection.
        self.tok_emb = pad_w(w(ks[4], (vocab, token_dim), scale=0.1),
                             self.v_pad, self.d_pad)
        self.w_txt = pad_w(w(ks[5], (token_dim, embed_dim)), self.d_pad, self.e_pad)
        self.b_txt = zeros_b(self.e_pad)

        # dist_pred_net params (DenseNetwork: E -> E//4 -> E//16 -> 1, ReLU)
        self.w_d1 = pad_w(w(ks[6], (embed_dim, h1), scale=0.1), self.e_pad, self.h1_pad)
        self.b_d1 = zeros_b(self.h1_pad)
        self.w_d2 = pad_w(w(ks[7], (h1, h2), scale=0.1), self.h1_pad, self.h2_pad)
        self.b_d2 = zeros_b(self.h2_pad)
        self.w_d3 = pad_w(w(ks[8], (h2, 1), scale=0.1), self.h2_pad, self.o_pad)
        self.b_d3 = zeros_b(self.o_pad)

    # --- helpers -------------------------------------------------------------

    @staticmethod
    def _bpad(b):
        return _round_up(b, SUBLANE_BF16)

    def _vision_inputs(self, obs_img, feat_text, current_img):
        B = obs_img.shape[0]
        bp = self._bpad(B)
        obs = _pad2(obs_img.reshape(B, -1), bp, self.k_pad).astype(jnp.bfloat16)
        cur = _pad2(current_img.reshape(B, -1), bp, self.k_pad).astype(jnp.bfloat16)
        txt = _pad2(feat_text, bp, self.t_pad).astype(jnp.bfloat16)
        return B, bp, obs, cur, txt

    def _vision_params(self):
        return (self.w_obs, self.b_obs, self.w_cur, self.b_cur,
                self.w_film, self.b_film,
                self.w_fuse_obs, self.w_fuse_cur, self.b_fuse)

    def _dist_params(self):
        return (self.w_d1, self.b_d1, self.w_d2, self.b_d2,
                self.w_d3, self.b_d3)

    # --- sub-networks (each one fused pallas_call) ---------------------------

    def vision_encoder(self, obs_img, feat_text, current_img):
        B, bp, obs, cur, txt = self._vision_inputs(obs_img, feat_text, current_img)
        out = pl.pallas_call(
            _vision_kernel,
            out_shape=jax.ShapeDtypeStruct((bp, self.e_pad), jnp.float32),
            in_specs=[_vmem_spec() for _ in range(12)],
            out_specs=_vmem_spec(),
            compiler_params=_COMPILER_PARAMS,
        )(obs, cur, txt, *self._vision_params())
        return out[:B, :self.embed_dim]

    def encode_text(self, inst_ref):
        B, T = inst_ref.shape
        bp = self._bpad(B)
        # Pad batch rows with -1 so they never match a vocab id -> zero rows.
        ids = jnp.pad(inst_ref.astype(jnp.int32), ((0, bp - B), (0, 0)),
                      constant_values=-1)
        out = pl.pallas_call(
            functools.partial(_text_kernel, seq_len=T),
            out_shape=jax.ShapeDtypeStruct((bp, self.e_pad), jnp.float32),
            in_specs=[_vmem_spec() for _ in range(4)],
            out_specs=_vmem_spec(),
            compiler_params=_COMPILER_PARAMS,
        )(ids, self.tok_emb, self.w_txt, self.b_txt)
        return out[:B, :self.embed_dim]

    def dist_pred_net(self, obsgoal_cond):
        B = obsgoal_cond.shape[0]
        bp = self._bpad(B)
        x = _pad2(obsgoal_cond, bp, self.e_pad).astype(jnp.bfloat16)
        out = pl.pallas_call(
            _dist_kernel,
            out_shape=jax.ShapeDtypeStruct((bp, self.o_pad), jnp.float32),
            in_specs=[_vmem_spec() for _ in range(7)],
            out_specs=_vmem_spec(),
            compiler_params=_COMPILER_PARAMS,
        )(x, *self._dist_params())
        return out[:B, :1]

    def vision_and_dist(self, obs_img, feat_text, current_img):
        """Fused vision_encoder -> dist_pred_net chain in ONE pallas_call."""
        B, bp, obs, cur, txt = self._vision_inputs(obs_img, feat_text, current_img)
        cond, dist = pl.pallas_call(
            _vision_dist_kernel,
            out_shape=(jax.ShapeDtypeStruct((bp, self.e_pad), jnp.float32),
                       jax.ShapeDtypeStruct((bp, self.o_pad), jnp.float32)),
            in_specs=[_vmem_spec() for _ in range(18)],
            out_specs=(_vmem_spec(), _vmem_spec()),
            compiler_params=_COMPILER_PARAMS,
        )(obs, cur, txt, *self._vision_params(), *self._dist_params())
        return cond[:B, :self.embed_dim], dist[:B, :1]

    # --- dispatcher (mirrors LeLaN_clip_temp.forward) -------------------------

    def __call__(self, func_name, **kwargs):
        if func_name == "vision_encoder":
            return self.vision_encoder(kwargs["obs_img"],
                                       kwargs["feat_text"],
                                       kwargs["current_img"])
        elif func_name == "text_encoder":
            return self.encode_text(kwargs["inst_ref"])
        elif func_name == "dist_pred_net":
            return self.dist_pred_net(kwargs["obsgoal_cond"])
        else:
            raise NotImplementedError


# ----------------------------------------------------------------------------
# Main
# ----------------------------------------------------------------------------

if __name__ == "__main__":
    key = jax.random.PRNGKey(0)
    k_model, k_obs, k_cur, k_txt, k_tok, k_cond = jax.random.split(key, 6)

    B, C, H, W = 2, 3, 16, 16
    T, E = 8, 32

    model = LeLaNClipTempPallas(k_model, img_c=C, img_hw=H,
                                text_dim=E, embed_dim=E)

    obs_img = jax.random.normal(k_obs, (B, C, H, W), jnp.float32)      # NCHW
    current_img = jax.random.normal(k_cur, (B, C, H, W), jnp.float32)  # NCHW
    feat_text = jax.random.normal(k_txt, (B, E), jnp.float32)
    inst_ref = jax.random.randint(k_tok, (B, T), 0, 64, jnp.int32)
    obsgoal_cond = jax.random.normal(k_cond, (B, E), jnp.float32)

    # Dispatcher (original module semantics: one sub-network per call).
    vis_out = model("vision_encoder", obs_img=obs_img,
                    feat_text=feat_text, current_img=current_img)
    txt_out = model("text_encoder", inst_ref=inst_ref)
    dist_out = model("dist_pred_net", obsgoal_cond=obsgoal_cond)

    # Fused vision -> dist chain (single pallas_call); must agree with the
    # chained dispatcher path.
    cond_fused, dist_fused = model.vision_and_dist(obs_img, feat_text,
                                                   current_img)
    dist_chained = model("dist_pred_net", obsgoal_cond=vis_out)

    jax.block_until_ready((vis_out, txt_out, dist_out, cond_fused,
                           dist_fused, dist_chained))

    assert vis_out.shape == (B, E)
    assert txt_out.shape == (B, E)
    assert dist_out.shape == (B, 1)
    assert cond_fused.shape == (B, E)
    assert dist_fused.shape == (B, 1)
    assert bool(jnp.all(jnp.isfinite(vis_out)))
    assert bool(jnp.all(jnp.isfinite(txt_out)))
    assert bool(jnp.all(jnp.isfinite(dist_out)))
    assert bool(jnp.allclose(cond_fused, vis_out, atol=1e-5, rtol=1e-5))
    assert bool(jnp.allclose(dist_fused, dist_chained, atol=1e-5, rtol=1e-5))
    print("KERNEL_OK")
</pallas_src>

<mosaic_0001>
module attributes {stable_mosaic.version = 11 : i64} {
  func.func @_vision_kernel(%arg0: memref<16x768xbf16, #tpu.memory_space<vmem>>, %arg1: memref<16x768xbf16, #tpu.memory_space<vmem>>, %arg2: memref<16x128xbf16, #tpu.memory_space<vmem>>, %arg3: memref<768x128xbf16, #tpu.memory_space<vmem>>, %arg4: memref<1x128xf32, #tpu.memory_space<vmem>>, %arg5: memref<768x128xbf16, #tpu.memory_space<vmem>>, %arg6: memref<1x128xf32, #tpu.memory_space<vmem>>, %arg7: memref<128x256xbf16, #tpu.memory_space<vmem>>, %arg8: memref<1x256xf32, #tpu.memory_space<vmem>>, %arg9: memref<128x128xbf16, #tpu.memory_space<vmem>>, %arg10: memref<128x128xbf16, #tpu.memory_space<vmem>>, %arg11: memref<1x128xf32, #tpu.memory_space<vmem>>, %arg12: memref<16x128xf32, #tpu.memory_space<vmem>>) attributes {dimension_semantics = [], scalar_prefetch = 0 : i64, scratch_operands = 0 : i64, tpu.core_type = #tpu.core_type<tc>} {
    %c0 = arith.constant 0 : index
    %c0_0 = arith.constant 0 : index
    %0 = vector.load %arg0[%c0, %c0_0] : memref<16x768xbf16, #tpu.memory_space<vmem>>, vector<16x768xbf16>
    %c0_1 = arith.constant 0 : index
    %c0_2 = arith.constant 0 : index
    %1 = vector.load %arg1[%c0_1, %c0_2] : memref<16x768xbf16, #tpu.memory_space<vmem>>, vector<16x768xbf16>
    %c0_3 = arith.constant 0 : index
    %c0_4 = arith.constant 0 : index
    %2 = vector.load %arg2[%c0_3, %c0_4] : memref<16x128xbf16, #tpu.memory_space<vmem>>, vector<16x128xbf16>
    %c0_5 = arith.constant 0 : index
    %c0_6 = arith.constant 0 : index
    %3 = vector.load %arg3[%c0_5, %c0_6] : memref<768x128xbf16, #tpu.memory_space<vmem>>, vector<768x128xbf16>
    %c0_7 = arith.constant 0 : index
    %c0_8 = arith.constant 0 : index
    %4 = vector.load %arg4[%c0_7, %c0_8] : memref<1x128xf32, #tpu.memory_space<vmem>>, vector<1x128xf32>
    %c0_9 = arith.constant 0 : index
    %c0_10 = arith.constant 0 : index
    %5 = vector.load %arg5[%c0_9, %c0_10] : memref<768x128xbf16, #tpu.memory_space<vmem>>, vector<768x128xbf16>
    %c0_11 = arith.constant 0 : index
    %c0_12 = arith.constant 0 : index
    %6 = vector.load %arg6[%c0_11, %c0_12] : memref<1x128xf32, #tpu.memory_space<vmem>>, vector<1x128xf32>
    %c0_13 = arith.constant 0 : index
    %c0_14 = arith.constant 0 : index
    %7 = vector.load %arg7[%c0_13, %c0_14] : memref<128x256xbf16, #tpu.memory_space<vmem>>, vector<128x256xbf16>
    %c0_15 = arith.constant 0 : index
    %c0_16 = arith.constant 0 : index
    %8 = vector.load %arg8[%c0_15, %c0_16] : memref<1x256xf32, #tpu.memory_space<vmem>>, vector<1x256xf32>
    %c0_17 = arith.constant 0 : index
    %c0_18 = arith.constant 0 : index
    %9 = vector.load %arg9[%c0_17, %c0_18] : memref<128x128xbf16, #tpu.memory_space<vmem>>, vector<128x128xbf16>
    %c0_19 = arith.constant 0 : index
    %c0_20 = arith.constant 0 : index
    %10 = vector.load %arg10[%c0_19, %c0_20] : memref<128x128xbf16, #tpu.memory_space<vmem>>, vector<128x128xbf16>
    %c0_21 = arith.constant 0 : index
    %c0_22 = arith.constant 0 : index
    %11 = vector.load %arg11[%c0_21, %c0_22] : memref<1x128xf32, #tpu.memory_space<vmem>>, vector<1x128xf32>
    %cst = arith.constant dense<0.000000e+00> : vector<16x128xf32>
    %12 = tpu.matmul %0, %3, %cst {dimension_numbers = #tpu.dot_dimension_numbers<[1], [0], [0], [1], [0, 0, 1, 1], [], []>} : vector<16x768xbf16>, vector<768x128xbf16>, vector<16x128xf32> -> vector<16x128xf32>
    %13 = vector.broadcast %4 : vector<1x128xf32> to vector<16x128xf32>
    %14 = arith.addf %12, %13 : vector<16x128xf32>
    %cst_23 = arith.constant 0.000000e+00 : f32
    %15 = vector.broadcast %cst_23 : f32 to vector<16x128xf32>
    %16 = arith.maximumf %14, %15 : vector<16x128xf32>
    %cst_24 = arith.constant dense<0.000000e+00> : vector<16x128xf32>
    %17 = tpu.matmul %1, %5, %cst_24 {dimension_numbers = #tpu.dot_dimension_numbers<[1], [0], [0], [1], [0, 0, 1, 1], [], []>} : vector<16x768xbf16>, vector<768x128xbf16>, vector<16x128xf32> -> vector<16x128xf32>
    %18 = vector.broadcast %6 : vector<1x128xf32> to vector<16x128xf32>
    %19 = arith.addf %17, %18 : vector<16x128xf32>
    %cst_25 = arith.constant 0.000000e+00 : f32
    %20 = vector.broadcast %cst_25 : f32 to vector<16x128xf32>
    %21 = arith.maximumf %19, %20 : vector<16x128xf32>
    %cst_26 = arith.constant dense<0.000000e+00> : vector<16x256xf32>
    %22 = tpu.matmul %2, %7, %cst_26 {dimension_numbers = #tpu.dot_dimension_numbers<[1], [0], [0], [1], [0, 0, 1, 1], [], []>} : vector<16x128xbf16>, vector<128x256xbf16>, vector<16x256xf32> -> vector<16x256xf32>
    %23 = vector.broadcast %8 : vector<1x256xf32> to vector<16x256xf32>
    %24 = arith.addf %22, %23 : vector<16x256xf32>
    %25 = vector.extract_strided_slice %24 {offsets = [0, 0], sizes = [16, 128], strides = [1, 1]} : vector<16x256xf32> to vector<16x128xf32>
    %26 = vector.extract_strided_slice %24 {offsets = [0, 128], sizes = [16, 128], strides = [1, 1]} : vector<16x256xf32> to vector<16x128xf32>
    %cst_27 = arith.constant 1.000000e+00 : f32
    %27 = vector.broadcast %cst_27 : f32 to vector<16x128xf32>
    %28 = arith.addf %27, %25 : vector<16x128xf32>
    %29 = arith.mulf %16, %28 : vector<16x128xf32>
    %30 = arith.addf %29, %26 : vector<16x128xf32>
    %31 = arith.truncf %30 : vector<16x128xf32> to vector<16x128xbf16>
    %cst_28 = arith.constant dense<0.000000e+00> : vector<16x128xf32>
    %32 = tpu.matmul %31, %9, %cst_28 {dimension_numbers = #tpu.dot_dimension_numbers<[1], [0], [0], [1], [0, 0, 1, 1], [], []>} : vector<16x128xbf16>, vector<128x128xbf16>, vector<16x128xf32> -> vector<16x128xf32>
    %33 = arith.truncf %21 : vector<16x128xf32> to vector<16x128xbf16>
    %cst_29 = arith.constant dense<0.000000e+00> : vector<16x128xf32>
    %34 = tpu.matmul %33, %10, %cst_29 {dimension_numbers = #tpu.dot_dimension_numbers<[1], [0], [0], [1], [0, 0, 1, 1], [], []>} : vector<16x128xbf16>, vector<128x128xbf16>, vector<16x128xf32> -> vector<16x128xf32>
    %35 = arith.addf %32, %34 : vector<16x128xf32>
    %36 = vector.broadcast %11 : vector<1x128xf32> to vector<16x128xf32>
    %37 = arith.addf %35, %36 : vector<16x128xf32>
    %cst_30 = arith.constant 0.000000e+00 : f32
    %38 = vector.broadcast %cst_30 : f32 to vector<16x128xf32>
    %39 = arith.maximumf %37, %38 : vector<16x128xf32>
    %c0_31 = arith.constant 0 : index
    %c0_32 = arith.constant 0 : index
    %40 = vector.load %arg12[%c0_31, %c0_32] : memref<16x128xf32, #tpu.memory_space<vmem>>, vector<16x128xf32>
    tpu.vector_store %arg12[%c0_31, %c0_32], %39 {strides = array<i32>} : memref<16x128xf32, #tpu.memory_space<vmem>>, vector<16x128xf32>,
    return
  }
}

</mosaic_0001>

<llo_original>
// kernel: tpu_custom_call.1
$region0: #{tpu_custom_call.1}
  #allocation0 [shape = 'u32[]', space=smem, size = 0x4, offset = 0x4, fixed_abs, tag = 'smem constant byte address 0x4 - core index']
  #allocation1 [shape = 'u32[144,128]{1,0:T(1,128)}', space=vmem, size = 0x12000, scoped, tag = 'internal scratch']
  %s0 = inlined_call_operand.hbm [shape: bf16[16,768], index: 0, kind: input, shape index: {}]
  %s1 = inlined_call_operand.hbm [shape: bf16[16,768], index: 1, kind: input, shape index: {}]
  %s2 = inlined_call_operand.hbm [shape: bf16[16,128], index: 2, kind: input, shape index: {}]
  %s3 = inlined_call_operand.hbm [shape: bf16[768,128], index: 3, kind: input, shape index: {}]
  %s4 = inlined_call_operand.vmem [shape: f32[1,128], index: 4, kind: input, shape index: {}]
  %s5 = inlined_call_operand.hbm [shape: bf16[768,128], index: 5, kind: input, shape index: {}]
  %s6 = inlined_call_operand.vmem [shape: f32[1,128], index: 6, kind: input, shape index: {}]
  %s7 = inlined_call_operand.hbm [shape: bf16[128,256], index: 7, kind: input, shape index: {}]
  %s8 = inlined_call_operand.vmem [shape: f32[1,256], index: 8, kind: input, shape index: {}]
  %s9 = inlined_call_operand.hbm [shape: bf16[128,128], index: 9, kind: input, shape index: {}]
  %s10 = inlined_call_operand.hbm [shape: bf16[128,128], index: 10, kind: input, shape index: {}]
  %s11 = inlined_call_operand.vmem [shape: f32[1,128], index: 11, kind: input, shape index: {}]
  %s12 = inlined_call_operand.hbm [shape: f32[16,128], index: 12, kind: output, shape index: {}]
  %s13 = sld [smem:[#allocation0]]
  $region90: #{tpu_custom_call.1} parent=0
    _
  %s15 = ssub.s32 1, %s13
  %s16 = scalar_select 0, %s15, %s13
  $region1: #{tpu_custom_call.1} parent=0
    #allocation2 [shape = 'u8[24576]{0}', space=vmem, size = 0x6000, scoped, tag = 'input window, operand 0, single buffered']
    #allocation3 [shape = 's32[1]{0}', space=sflag, size = 0x4, scoped, tag = 'scoped memory for tpu_custom_call.1']
    #allocation4 [shape = 's32[1]{0}', space=sflag, size = 0x4, scoped, tag = 'scoped memory for tpu_custom_call.1']
    #allocation5 [shape = 'u8[24576]{0}', space=vmem, size = 0x6000, scoped, tag = 'input window, operand 1, single buffered']
    #allocation6 [shape = 's32[1]{0}', space=sflag, size = 0x4, scoped, tag = 'scoped memory for tpu_custom_call.1']
    #allocation7 [shape = 'u8[4096]{0}', space=vmem, size = 0x1000, scoped, tag = 'input window, operand 2, single buffered']
    #allocation8 [shape = 'u8[196608]{0}', space=vmem, size = 0x30000, scoped, tag = 'input window, operand 3, single buffered']
    #allocation9 [shape = 's32[1]{0}', space=sflag, size = 0x4, scoped, tag = 'scoped memory for tpu_custom_call.1']
    #allocation10 [shape = 'u8[196608]{0}', space=vmem, size = 0x30000, scoped, tag = 'input window, operand 5, single buffered']
    #allocation11 [shape = 'u8[65536]{0}', space=vmem, size = 0x10000, scoped, tag = 'input window, operand 7, single buffered']
    #allocation12 [shape = 's32[1]{0}', space=sflag, size = 0x4, scoped, tag = 'scoped memory for tpu_custom_call.1']
    #allocation13 [shape = 'u8[32768]{0}', space=vmem, size = 0x8000, scoped, tag = 'input window, operand 9, single buffered']
    #allocation14 [shape = 'u8[32768]{0}', space=vmem, size = 0x8000, scoped, tag = 'input window, operand 10, single buffered']
    #allocation15 [shape = 's32[1]{0}', space=sflag, size = 0x4, scoped, tag = 'scoped memory for tpu_custom_call.1']
    #allocation16 [shape = 'u8[8192]{0}', space=vmem, size = 0x2000, scoped, tag = 'output window, operand 0, single buffered']
    %17 = vsyncpa [#allocation3], 0
    %18 = vsyncpa [#allocation6], 0
    %19 = vsyncpa [#allocation9], 0
    %20 = vsyncpa [#allocation12], 0
    %21 = vsyncpa [#allocation15], 0
    %22 = vsyncpa [#allocation4], 0
    // Predicated region
    $region2: #{tpu_custom_call.1} parent=1 // pred_check
      _
    $region3: #{tpu_custom_call.1} parent=1 // pred_check_branch
      %24 = sbr.rel (0) target = $region5
    $region4: #{tpu_custom_call.1} parent=1 // pred_region
      %s26 = ssub.s32 768, 768
      %27 = vsyncadd [#allocation3], %s26
      %s28 = sshll.u32 [#allocation2], 4
      %s29 = int_to_ptr.vmem [resolvable:$true] %s28
      %34 = dma.hbm_to_vmem [thread:$0]  %s0, 768, %s29, [#allocation3], 384, 384, 24
    $region5: #{tpu_custom_call.1} parent=1 // pred_fallthru
      _
    // Predicated region
    $region6: #{tpu_custom_call.1} parent=1 // pred_check
      _
    $region7: #{tpu_custom_call.1} parent=1 // pred_check_branch
      %36 = sbr.rel (0) target = $region9
    $region8: #{tpu_custom_call.1} parent=1 // pred_region
      %s38 = ssub.s32 768, 768
      %39 = vsyncadd [#allocation6], %s38
      %s40 = sshll.u32 [#allocation5], 4
      %s41 = int_to_ptr.vmem [resolvable:$true] %s40
      %46 = dma.hbm_to_vmem [thread:$0]  %s1, 768, %s41, [#allocation6], 384, 384, 24
    $region9: #{tpu_custom_call.1} parent=1 // pred_fallthru
      _
    // Predicated region
    $region10: #{tpu_custom_call.1} parent=1 // pred_check
      _
    $region11: #{tpu_custom_call.1} parent=1 // pred_check_branch
      %48 = sbr.rel (0) target = $region13
    $region12: #{tpu_custom_call.1} parent=1 // pred_region
      %s50 = ssub.s32 128, 128
      %51 = vsyncadd [#allocation6], %s50
      %s52 = sshll.u32 [#allocation7], 4
      %s53 = int_to_ptr.vmem [resolvable:$true] %s52
      %58 = dma.hbm_to_vmem [thread:$0]  %s2, 128, %s53, [#allocation6], 64, 64, 4
    $region13: #{tpu_custom_call.1} parent=1 // pred_fallthru
      _
    // Predicated region
    $region14: #{tpu_custom_call.1} parent=1 // pred_check
      _
    $region15: #{tpu_custom_call.1} parent=1 // pred_check_branch
      %60 = sbr.rel (0) target = $region17
    $region16: #{tpu_custom_call.1} parent=1 // pred_region
      %s62 = ssub.s32 6144, 6144
      %63 = vsyncadd [#allocation9], %s62
      %s64 = sshll.u32 [#allocation8], 4
      %s65 = int_to_ptr.vmem [resolvable:$true] %s64
      %70 = dma.hbm_to_vmem [thread:$0]  %s3, 6144, %s65, [#allocation9], 64, 64, 4
    $region17: #{tpu_custom_call.1} parent=1 // pred_fallthru
      _
    // Predicated region
    $region18: #{tpu_custom_call.1} parent=1 // pred_check
      _
    $region19: #{tpu_custom_call.1} parent=1 // pred_check_branch
      %72 = sbr.rel (0) target = $region21
    $region20: #{tpu_custom_call.1} parent=1 // pred_region
      _
    $region21: #{tpu_custom_call.1} parent=1 // pred_fallthru
      _
    // Predicated region
    $region22: #{tpu_custom_call.1} parent=1 // pred_check
      _
    $region23: #{tpu_custom_call.1} parent=1 // pred_check_branch
      %74 = sbr.rel (0) target = $region25
    $region24: #{tpu_custom_call.1} parent=1 // pred_region
      %s76 = ssub.s32 6144, 6144
      %77 = vsyncadd [#allocation9], %s76
      %s78 = sshll.u32 [#allocation10], 4
      %s79 = int_to_ptr.vmem [resolvable:$true] %s78
      %84 = dma.hbm_to_vmem [thread:$0]  %s5, 6144, %s79, [#allocation9], 64, 64, 4
    $region25: #{tpu_custom_call.1} parent=1 // pred_fallthru
      _
    // Predicated region
    $region26: #{tpu_custom_call.1} parent=1 // pred_check
      _
    $region27: #{tpu_custom_call.1} parent=1 // pred_check_branch
      %86 = sbr.rel (0) target = $region29
    $region28: #{tpu_custom_call.1} parent=1 // pred_region
      _
    $region29: #{tpu_custom_call.1} parent=1 // pred_fallthru
      _
    // Predicated region
    $region30: #{tpu_custom_call.1} parent=1 // pred_check
      _
    $region31: #{tpu_custom_call.1} parent=1 // pred_check_branch
      %88 = sbr.rel (0) target = $region33
    $region32: #{tpu_custom_call.1} parent=1 // pred_region
      %s90 = ssub.s32 2048, 2048
      %91 = vsyncadd [#allocation12], %s90
      %s92 = sshll.u32 [#allocation11], 4
      %s93 = int_to_ptr.vmem [resolvable:$true] %s92
      %98 = dma.hbm_to_vmem [thread:$0]  %s7, 2048, %s93, [#allocation12], 128, 128, 8
    $region33: #{tpu_custom_call.1} parent=1 // pred_fallthru
      _
    // Predicated region
    $region34: #{tpu_custom_call.1} parent=1 // pred_check
      _
    $region35: #{tpu_custom_call.1} parent=1 // pred_check_branch
      %100 = sbr.rel (0) target = $region37
    $region36: #{tpu_custom_call.1} parent=1 // pred_region
      _
    $region37: #{tpu_custom_call.1} parent=1 // pred_fallthru
      _
    // Predicated region
    $region38: #{tpu_custom_call.1} parent=1 // pred_check
      _
    $region39: #{tpu_custom_call.1} parent=1 // pred_check_branch
      %102 = sbr.rel (0) target = $region41
    $region40: #{tpu_custom_call.1} parent=1 // pred_region
      %s104 = ssub.s32 1024, 1024
      %105 = vsyncadd [#allocation12], %s104
      %s106 = sshll.u32 [#allocation13], 4
      %s107 = int_to_ptr.vmem [resolvable:$true] %s106
      %112 = dma.hbm_to_vmem [thread:$0]  %s9, 1024, %s107, [#allocation12], 64, 64, 4
    $region41: #{tpu_custom_call.1} parent=1 // pred_fallthru
      _
    // Predicated region
    $region42: #{tpu_custom_call.1} parent=1 // pred_check
      _
    $region43: #{tpu_custom_call.1} parent=1 // pred_check_branch
      %114 = sbr.rel (0) target = $region45
    $region44: #{tpu_custom_call.1} parent=1 // pred_region
      %s116 = ssub.s32 1024, 1024
      %117 = vsyncadd [#allocation15], %s116
      %s118 = sshll.u32 [#allocation14], 4
      %s119 = int_to_ptr.vmem [resolvable:$true] %s118
      %124 = dma.hbm_to_vmem [thread:$0]  %s10, 1024, %s119, [#allocation15], 64, 64, 4
    $region45: #{tpu_custom_call.1} parent=1 // pred_fallthru
      _
    // Predicated region
    $region46: #{tpu_custom_call.1} parent=1 // pred_check
      _
    $region47: #{tpu_custom_call.1} parent=1 // pred_check_branch
      %126 = sbr.rel (0) target = $region49
    $region48: #{tpu_custom_call.1} parent=1 // pred_region
      _
    $region49: #{tpu_custom_call.1} parent=1 // pred_fallthru
      _
    // Predicated region
    $region50: #{tpu_custom_call.1} parent=1 // pred_check
      _
    $region51: #{tpu_custom_call.1} parent=1 // pred_check_branch
      %128 = sbr.rel (0) target = $region53
    $region52: #{tpu_custom_call.1} parent=1 // pred_region
      %129 = dma.done [#allocation3], 768
    $region53: #{tpu_custom_call.1} parent=1 // pred_fallthru
      _
    // Predicated region
    $region54: #{tpu_custom_call.1} parent=1 // pred_check
      _
    $region55: #{tpu_custom_call.1} parent=1 // pred_check_branch
      %131 = sbr.rel (0) target = $region57
    $region56: #{tpu_custom_call.1} parent=1 // pred_region
      %132 = dma.done [#allocation6], 768
    $region57: #{tpu_custom_call.1} parent=1 // pred_fallthru
      _
    // Predicated region
    $region58: #{tpu_custom_call.1} parent=1 // pred_check
      _
    $region59: #{tpu_custom_call.1} parent=1 // pred_check_branch
      %134 = sbr.rel (0) target = $region61
    $region60: #{tpu_custom_call.1} parent=1 // pred_region
      %135 = dma.done [#allocation6], 128
    $region61: #{tpu_custom_call.1} parent=1 // pred_fallthru
      _
    // Predicated region
    $region62: #{tpu_custom_call.1} parent=1 // pred_check
      _
    $region63: #{tpu_custom_call.1} parent=1 // pred_check_branch
      %137 = sbr.rel (0) target = $region65
    $region64: #{tpu_custom_call.1} parent=1 // pred_region
      %138 = dma.done [#allocation9], 6144
    $region65: #{tpu_custom_call.1} parent=1 // pred_fallthru
      _
    // Predicated region
    $region66: #{tpu_custom_call.1} parent=1 // pred_check
      _
    $region67: #{tpu_custom_call.1} parent=1 // pred_check_branch
      %140 = sbr.rel (0) target = $region69
    $region68: #{tpu_custom_call.1} parent=1 // pred_region
      %141 = dma.done [#allocation9], 6144
    $region69: #{tpu_custom_call.1} parent=1 // pred_fallthru
      _
    // Predicated region
    $region70: #{tpu_custom_call.1} parent=1 // pred_check
      _
    $region71: #{tpu_custom_call.1} parent=1 // pred_check_branch
      %143 = sbr.rel (0) target = $region73
    $region72: #{tpu_custom_call.1} parent=1 // pred_region
      %144 = dma.done [#allocation12], 2048
    $region73: #{tpu_custom_call.1} parent=1 // pred_fallthru
      _
    // Predicated region
    $region74: #{tpu_custom_call.1} parent=1 // pred_check
      _
    $region75: #{tpu_custom_call.1} parent=1 // pred_check_branch
      %146 = sbr.rel (0) target = $region77
    $region76: #{tpu_custom_call.1} parent=1 // pred_region
      %147 = dma.done [#allocation12], 1024
    $region77: #{tpu_custom_call.1} parent=1 // pred_fallthru
      _
    // Predicated region
    $region78: #{tpu_custom_call.1} parent=1 // pred_check
      _
    $region79: #{tpu_custom_call.1} parent=1 // pred_check_branch
      %149 = sbr.rel (0) target = $region81
    $region80: #{tpu_custom_call.1} parent=1 // pred_region
      %150 = dma.done [#allocation15], 1024
    $region81: #{tpu_custom_call.1} parent=1 // pred_fallthru
      _
    %v152 = vld [vmem:[#allocation2] sm:$0xff]
    %v153 = vld [vmem:[#allocation2 + $0x8] sm:$0xff]
    %v154 = vld [vmem:[#allocation2 + $0x10] sm:$0xff]
    %v155 = vld [vmem:[#allocation2 + $0x18] sm:$0xff]
    %v156 = vld [vmem:[#allocation2 + $0x20] sm:$0xff]
    %v157 = vld [vmem:[#allocation2 + $0x28] sm:$0xff]
    %v158 = vld [vmem:[#allocation5] sm:$0xff]
    %v159 = vld [vmem:[#allocation5 + $0x8] sm:$0xff]
    %v160 = vld [vmem:[#allocation5 + $0x10] sm:$0xff]
    %v161 = vld [vmem:[#allocation5 + $0x18] sm:$0xff]
    %v162 = vld [vmem:[#allocation5 + $0x20] sm:$0xff]
    %v163 = vld [vmem:[#allocation5 + $0x28] sm:$0xff]
    %v164 = vld [vmem:[#allocation7] sm:$0xf]
    %v165 = vld [vmem:[#allocation7 + $0x4] sm:$0xf]
    %v166 = vld [vmem:[#allocation8] sm:$0xf]
    %v167 = vld [vmem:[#allocation8 + $0x4] sm:$0xf]
    %v168 = vld [vmem:[#allocation8 + $0x8] sm:$0xf]
    %v169 = vld [vmem:[#allocation8 + $0xc] sm:$0xf]
    %v170 = vld [vmem:[#allocation8 + $0x10] sm:$0xf]
    %v171 = vld [vmem:[#allocation8 + $0x14] sm:$0xf]
    %v172 = vld [vmem:[#allocation8 + $0x18] sm:$0xf]
    %v173 = vld [vmem:[#allocation8 + $0x1c] sm:$0xf]
    %v174 = vld [vmem:[#allocation8 + $0x20] sm:$0xf]
    %v175 = vld [vmem:[#allocation8 + $0x24] sm:$0xf]
    %v176 = vld [vmem:[#allocation8 + $0x28] sm:$0xf]
    %v177 = vld [vmem:[#allocation8 + $0x2c] sm:$0xf]
    %v178 = vld [vmem:[#allocation8 + $0x30] sm:$0xf]
    %v179 = vld [vmem:[#allocation8 + $0x34] sm:$0xf]
    %v180 = vld [vmem:[#allocation8 + $0x38] sm:$0xf]
    %v181 = vld [vmem:[#allocation8 + $0x3c] sm:$0xf]
    %v182 = vld [vmem:[#allocation8 + $0x40] sm:$0xf]
    %v183 = vld [vmem:[#allocation8 + $0x44] sm:$0xf]
    %v184 = vld [vmem:[#allocation8 + $0x48] sm:$0xf]
    %v185 = vld [vmem:[#allocation8 + $0x4c] sm:$0xf]
    %v186 = vld [vmem:[#allocation8 + $0x50] sm:$0xf]
    %v187 = vld [vmem:[#allocation8 + $0x54] sm:$0xf]
    %v188 = vld [vmem:[#allocation8 + $0x58] sm:$0xf]
    %v189 = vld [vmem:[#allocation8 + $0x5c] sm:$0xf]
    %v190 = vld [vmem:[#allocation8 + $0x60] sm:$0xf]
    %v191 = vld [vmem:[#allocation8 + $0x64] sm:$0xf]
    %v192 = vld [vmem:[#allocation8 + $0x68] sm:$0xf]
    %v193 = vld [vmem:[#allocation8 + $0x6c] sm:$0xf]
    %v194 = vld [vmem:[#allocation8 + $0x70] sm:$0xf]
    %v195 = vld [vmem:[#allocation8 + $0x74] sm:$0xf]
    %v196 = vld [vmem:[#allocation8 + $0x78] sm:$0xf]
    %v197 = vld [vmem:[#allocation8 + $0x7c] sm:$0xf]
    %v198 = vld [vmem:[#allocation8 + $0x80] sm:$0xf]
    %v199 = vld [vmem:[#allocation8 + $0x84] sm:$0xf]
    %v200 = vld [vmem:[#allocation8 + $0x88] sm:$0xf]
    %v201 = vld [vmem:[#allocation8 + $0x8c] sm:$0xf]
    %v202 = vld [vmem:[#allocation8 + $0x90] sm:$0xf]
    %v203 = vld [vmem:[#allocation8 + $0x94] sm:$0xf]
    %v204 = vld [vmem:[#allocation8 + $0x98] sm:$0xf]
    %v205 = vld [vmem:[#allocation8 + $0x9c] sm:$0xf]
    %v206 = vld [vmem:[#allocation8 + $0xa0] sm:$0xf]
    %v207 = vld [vmem:[#allocation8 + $0xa4] sm:$0xf]
    %v208 = vld [vmem:[#allocation8 + $0xa8] sm:$0xf]
    %v209 = vld [vmem:[#allocation8 + $0xac] sm:$0xf]
    %v210 = vld [vmem:[#allocation8 + $0xb0] sm:$0xf]
    %v211 = vld [vmem:[#allocation8 + $0xb4] sm:$0xf]
    %v212 = vld [vmem:[#allocation8 + $0xb8] sm:$0xf]
    %v213 = vld [vmem:[#allocation8 + $0xbc] sm:$0xf]
    %v214 = vld [vmem:[#allocation8 + $0xc0] sm:$0xf]
    %v215 = vld [vmem:[#allocation8 + $0xc4] sm:$0xf]
    %v216 = vld [vmem:[#allocation8 + $0xc8] sm:$0xf]
    %v217 = vld [vmem:[#allocation8 + $0xcc] sm:$0xf]
    %v218 = vld [vmem:[#allocation8 + $0xd0] sm:$0xf]
    %v219 = vld [vmem:[#allocation8 + $0xd4] sm:$0xf]
    %v220 = vld [vmem:[#allocation8 + $0xd8] sm:$0xf]
    %v221 = vld [vmem:[#allocation8 + $0xdc] sm:$0xf]
    %v222 = vld [vmem:[#allocation8 + $0xe0] sm:$0xf]
    %v223 = vld [vmem:[#allocation8 + $0xe4] sm:$0xf]
    %v224 = vld [vmem:[#allocation8 + $0xe8] sm:$0xf]
    %v225 = vld [vmem:[#allocation8 + $0xec] sm:$0xf]
    %v226 = vld [vmem:[#allocation8 + $0xf0] sm:$0xf]
    %v227 = vld [vmem:[#allocation8 + $0xf4] sm:$0xf]
    %v228 = vld [vmem:[#allocation8 + $0xf8] sm:$0xf]
    %v229 = vld [vmem:[#allocation8 + $0xfc] sm:$0xf]
    %v230 = vld [vmem:[#allocation8 + $0x100] sm:$0xf]
    %v231 = vld [vmem:[#allocation8 + $0x104] sm:$0xf]
    %v232 = vld [vmem:[#allocation8 + $0x108] sm:$0xf]
    %v233 = vld [vmem:[#allocation8 + $0x10c] sm:$0xf]
    %v234 = vld [vmem:[#allocation8 + $0x110] sm:$0xf]
    %v235 = vld [vmem:[#allocation8 + $0x114] sm:$0xf]
    %v236 = vld [vmem:[#allocation8 + $0x118] sm:$0xf]
    %v237 = vld [vmem:[#allocation8 + $0x11c] sm:$0xf]
    %v238 = vld [vmem:[#allocation8 + $0x120] sm:$0xf]
    %v239 = vld [vmem:[#allocation8 + $0x124] sm:$0xf]
    %v240 = vld [vmem:[#allocation8 + $0x128] sm:$0xf]
    %v241 = vld [vmem:[#allocation8 + $0x12c] sm:$0xf]
    %v242 = vld [vmem:[#allocation8 + $0x130] sm:$0xf]
    %v243 = vld [vmem:[#allocation8 + $0x134] sm:$0xf]
    %v244 = vld [vmem:[#allocation8 + $0x138] sm:$0xf]
    %v245 = vld [vmem:[#allocation8 + $0x13c] sm:$0xf]
    %v246 = vld [vmem:[#allocation8 + $0x140] sm:$0xf]
    %v247 = vld [vmem:[#allocation8 + $0x144] sm:$0xf]
    %v248 = vld [vmem:[#allocation8 + $0x148] sm:$0xf]
    %v249 = vld [vmem:[#allocation8 + $0x14c] sm:$0xf]
    %v250 = vld [vmem:[#allocation8 + $0x150] sm:$0xf]
    %v251 = vld [vmem:[#allocation8 + $0x154] sm:$0xf]
    %v252 = vld [vmem:[#allocation8 + $0x158] sm:$0xf]
    %v253 = vld [vmem:[#allocation8 + $0x15c] sm:$0xf]
    %v254 = vld [vmem:[#allocation8 + $0x160] sm:$0xf]
    %v255 = vld [vmem:[#allocation8 + $0x164] sm:$0xf]
    %v256 = vld [vmem:[#allocation8 + $0x168] sm:$0xf]
    %v257 = vld [vmem:[#allocation8 + $0x16c] sm:$0xf]
    %v258 = vld [vmem:[#allocation8 + $0x170] sm:$0xf]
    %v259 = vld [vmem:[#allocation8 + $0x174] sm:$0xf]
    %v260 = vld [vmem:[#allocation8 + $0x178] sm:$0xf]
    %v261 = vld [vmem:[#allocation8 + $0x17c] sm:$0xf]
    %v262 = vld [vmem:[%s4] sm:$0x1]
    %v263 = vld [vmem:[#allocation10] sm:$0xf]
    %v264 = vld [vmem:[#allocation10 + $0x4] sm:$0xf]
    %v265 = vld [vmem:[#allocation10 + $0x8] sm:$0xf]
    %v266 = vld [vmem:[#allocation10 + $0xc] sm:$0xf]
    %v267 = vld [vmem:[#allocation10 + $0x10] sm:$0xf]
    %v268 = vld [vmem:[#allocation10 + $0x14] sm:$0xf]
    %v269 = vld [vmem:[#allocation10 + $0x18] sm:$0xf]
    %v270 = vld [vmem:[#allocation10 + $0x1c] sm:$0xf]
    %v271 = vld [vmem:[#allocation10 + $0x20] sm:$0xf]
    %v272 = vld [vmem:[#allocation10 + $0x24] sm:$0xf]
    %v273 = vld [vmem:[#allocation10 + $0x28] sm:$0xf]
    %v274 = vld [vmem:[#allocation10 + $0x2c] sm:$0xf]
    %v275 = vld [vmem:[#allocation10 + $0x30] sm:$0xf]
    %v276 = vld [vmem:[#allocation10 + $0x34] sm:$0xf]
    %v277 = vld [vmem:[#allocation10 + $0x38] sm:$0xf]
    %v278 = vld [vmem:[#allocation10 + $0x3c] sm:$0xf]
    %v279 = vld [vmem:[#allocation10 + $0x40] sm:$0xf]
    %v280 = vld [vmem:[#allocation10 + $0x44] sm:$0xf]
    %v281 = vld [vmem:[#allocation10 + $0x48] sm:$0xf]
    %v282 = vld [vmem:[#allocation10 + $0x4c] sm:$0xf]
    %v283 = vld [vmem:[#allocation10 + $0x50] sm:$0xf]
    %v284 = vld [vmem:[#allocation10 + $0x54] sm:$0xf]
    %v285 = vld [vmem:[#allocation10 + $0x58] sm:$0xf]
    %v286 = vld [vmem:[#allocation10 + $0x5c] sm:$0xf]
    %v287 = vld [vmem:[#allocation10 + $0x60] sm:$0xf]
    %v288 = vld [vmem:[#allocation10 + $0x64] sm:$0xf]
    %v289 = vld [vmem:[#allocation10 + $0x68] sm:$0xf]
    %v290 = vld [vmem:[#allocation10 + $0x6c] sm:$0xf]
    %v291 = vld [vmem:[#allocation10 + $0x70] sm:$0xf]
    %v292 = vld [vmem:[#allocation10 + $0x74] sm:$0xf]
    %v293 = vld [vmem:[#allocation10 + $0x78] sm:$0xf]
    %v294 = vld [vmem:[#allocation10 + $0x7c] sm:$0xf]
    %v295 = vld [vmem:[#allocation10 + $0x80] sm:$0xf]
    %v296 = vld [vmem:[#allocation10 + $0x84] sm:$0xf]
    %v297 = vld [vmem:[#allocation10 + $0x88] sm:$0xf]
    %v298 = vld [vmem:[#allocation10 + $0x8c] sm:$0xf]
    %v299 = vld [vmem:[#allocation10 + $0x90] sm:$0xf]
    %v300 = vld [vmem:[#allocation10 + $0x94] sm:$0xf]
    %v301 = vld [vmem:[#allocation10 + $0x98] sm:$0xf]
    %v302 = vld [vmem:[#allocation10 + $0x9c] sm:$0xf]
    %v303 = vld [vmem:[#allocation10 + $0xa0] sm:$0xf]
    %v304 = vld [vmem:[#allocation10 + $0xa4] sm:$0xf]
    %v305 = vld [vmem:[#allocation10 + $0xa8] sm:$0xf]
    %v306 = vld [vmem:[#allocation10 + $0xac] sm:$0xf]
    %v307 = vld [vmem:[#allocation10 + $0xb0] sm:$0xf]
    %v308 = vld [vmem:[#allocation10 + $0xb4] sm:$0xf]
    %v309 = vld [vmem:[#allocation10 + $0xb8] sm:$0xf]
    %v310 = vld [vmem:[#allocation10 + $0xbc] sm:$0xf]
    %v311 = vld [vmem:[#allocation10 + $0xc0] sm:$0xf]
    %v312 = vld [vmem:[#allocation10 + $0xc4] sm:$0xf]
    %v313 = vld [vmem:[#allocation10 + $0xc8] sm:$0xf]
    %v314 = vld [vmem:[#allocation10 + $0xcc] sm:$0xf]
    %v315 = vld [vmem:[#allocation10 + $0xd0] sm:$0xf]
    %v316 = vld [vmem:[#allocation10 + $0xd4] sm:$0xf]
    %v317 = vld [vmem:[#allocation10 + $0xd8] sm:$0xf]
    %v318 = vld [vmem:[#allocation10 + $0xdc] sm:$0xf]
    %v319 = vld [vmem:[#allocation10 + $0xe0] sm:$0xf]
    %v320 = vld [vmem:[#allocation10 + $0xe4] sm:$0xf]
    %v321 = vld [vmem:[#allocation10 + $0xe8] sm:$0xf]
    %v322 = vld [vmem:[#allocation10 + $0xec] sm:$0xf]
    %v323 = vld [vmem:[#allocation10 + $0xf0] sm:$0xf]
    %v324 = vld [vmem:[#allocation10 + $0xf4] sm:$0xf]
    %v325 = vld [vmem:[#allocation10 + $0xf8] sm:$0xf]
    %v326 = vld [vmem:[#allocation10 + $0xfc] sm:$0xf]
    %v327 = vld [vmem:[#allocation10 + $0x100] sm:$0xf]
    %v328 = vld [vmem:[#allocation10 + $0x104] sm:$0xf]
    %v329 = vld [vmem:[#allocation10 + $0x108] sm:$0xf]
    %v330 = vld [vmem:[#allocation10 + $0x10c] sm:$0xf]
    %v331 = vld [vmem:[#allocation10 + $0x110] sm:$0xf]
    %v332 = vld [vmem:[#allocation10 + $0x114] sm:$0xf]
    %v333 = vld [vmem:[#allocation10 + $0x118] sm:$0xf]
    %v334 = vld [vmem:[#allocation10 + $0x11c] sm:$0xf]
    %v335 = vld [vmem:[#allocation10 + $0x120] sm:$0xf]
    %v336 = vld [vmem:[#allocation10 + $0x124] sm:$0xf]
    %v337 = vld [vmem:[#allocation10 + $0x128] sm:$0xf]
    %v338 = vld [vmem:[#allocation10 + $0x12c] sm:$0xf]
    %v339 = vld [vmem:[#allocation10 + $0x130] sm:$0xf]
    %v340 = vld [vmem:[#allocation10 + $0x134] sm:$0xf]
    %v341 = vld [vmem:[#allocation10 + $0x138] sm:$0xf]
    %v342 = vld [vmem:[#allocation10 + $0x13c] sm:$0xf]
    %v343 = vld [vmem:[#allocation10 + $0x140] sm:$0xf]
    %v344 = vld [vmem:[#allocation10 + $0x144] sm:$0xf]
    %v345 = vld [vmem:[#allocation10 + $0x148] sm:$0xf]
    %v346 = vld [vmem:[#allocation10 + $0x14c] sm:$0xf]
    %v347 = vld [vmem:[#allocation10 + $0x150] sm:$0xf]
    %v348 = vld [vmem:[#allocation10 + $0x154] sm:$0xf]
    %v349 = vld [vmem:[#allocation10 + $0x158] sm:$0xf]
    %v350 = vld [vmem:[#allocation10 + $0x15c] sm:$0xf]
    %v351 = vld [vmem:[#allocation10 + $0x160] sm:$0xf]
    %v352 = vld [vmem:[#allocation10 + $0x164] sm:$0xf]
    %v353 = vld [vmem:[#allocation10 + $0x168] sm:$0xf]
    %v354 = vld [vmem:[#allocation10 + $0x16c] sm:$0xf]
    %v355 = vld [vmem:[#allocation10 + $0x170] sm:$0xf]
    %v356 = vld [vmem:[#allocation10 + $0x174] sm:$0xf]
    %v357 = vld [vmem:[#allocation10 + $0x178] sm:$0xf]
    %v358 = vld [vmem:[#allocation10 + $0x17c] sm:$0xf]
    %v359 = vld [vmem:[%s6] sm:$0x1]
    %v360 = vld [vmem:[#allocation11] sm:$0xff]
    %v361 = vld [vmem:[#allocation11 + $0x8] sm:$0xff]
    %v362 = vld [vmem:[#allocation11 + $0x10] sm:$0xff]
    %v363 = vld [vmem:[#allocation11 + $0x18] sm:$0xff]
    %v364 = vld [vmem:[#allocation11 + $0x20] sm:$0xff]
    %v365 = vld [vmem:[#allocation11 + $0x28] sm:$0xff]
    %v366 = vld [vmem:[#allocation11 + $0x30] sm:$0xff]
    %v367 = vld [vmem:[#allocation11 + $0x38] sm:$0xff]
    %v368 = vld [vmem:[#allocation11 + $0x40] sm:$0xff]
    %v369 = vld [vmem:[#allocation11 + $0x48] sm:$0xff]
    %v370 = vld [vmem:[#allocation11 + $0x50] sm:$0xff]
    %v371 = vld [vmem:[#allocation11 + $0x58] sm:$0xff]
    %v372 = vld [vmem:[#allocation11 + $0x60] sm:$0xff]
    %v373 = vld [vmem:[#allocation11 + $0x68] sm:$0xff]
    %v374 = vld [vmem:[#allocation11 + $0x70] sm:$0xff]
    %v375 = vld [vmem:[#allocation11 + $0x78] sm:$0xff]
    %v376 = vld [vmem:[%s8] sm:$0x3]
    %v377 = vld [vmem:[#allocation13] sm:$0xf]
    %v378 = vld [vmem:[#allocation13 + $0x4] sm:$0xf]
    %v379 = vld [vmem:[#allocation13 + $0x8] sm:$0xf]
    %v380 = vld [vmem:[#allocation13 + $0xc] sm:$0xf]
    %v381 = vld [vmem:[#allocation13 + $0x10] sm:$0xf]
    %v382 = vld [vmem:[#allocation13 + $0x14] sm:$0xf]
    %v383 = vld [vmem:[#allocation13 + $0x18] sm:$0xf]
    %v384 = vld [vmem:[#allocation13 + $0x1c] sm:$0xf]
    %v385 = vld [vmem:[#allocation13 + $0x20] sm:$0xf]
    %v386 = vld [vmem:[#allocation13 + $0x24] sm:$0xf]
    %v387 = vld [vmem:[#allocation13 + $0x28] sm:$0xf]
    %v388 = vld [vmem:[#allocation13 + $0x2c] sm:$0xf]
    %v389 = vld [vmem:[#allocation13 + $0x30] sm:$0xf]
    %v390 = vld [vmem:[#allocation13 + $0x34] sm:$0xf]
    %v391 = vld [vmem:[#allocation13 + $0x38] sm:$0xf]
    %v392 = vld [vmem:[#allocation13 + $0x3c] sm:$0xf]
    %v393 = vld [vmem:[#allocation14] sm:$0xf]
    %v394 = vld [vmem:[#allocation14 + $0x4] sm:$0xf]
    %v395 = vld [vmem:[#allocation14 + $0x8] sm:$0xf]
    %v396 = vld [vmem:[#allocation14 + $0xc] sm:$0xf]
    %v397 = vld [vmem:[#allocation14 + $0x10] sm:$0xf]
    %v398 = vld [vmem:[#allocation14 + $0x14] sm:$0xf]
    %v399 = vld [vmem:[#allocation14 + $0x18] sm:$0xf]
    %v400 = vld [vmem:[#allocation14 + $0x1c] sm:$0xf]
    %v401 = vld [vmem:[#allocation14 + $0x20] sm:$0xf]
    %v402 = vld [vmem:[#allocation14 + $0x24] sm:$0xf]
    %v403 = vld [vmem:[#allocation14 + $0x28] sm:$0xf]
    %v404 = vld [vmem:[#allocation14 + $0x2c] sm:$0xf]
    %v405 = vld [vmem:[#allocation14 + $0x30] sm:$0xf]
    %v406 = vld [vmem:[#allocation14 + $0x34] sm:$0xf]
    %v407 = vld [vmem:[#allocation14 + $0x38] sm:$0xf]
    %v408 = vld [vmem:[#allocation14 + $0x3c] sm:$0xf]
    %v409 = vld [vmem:[%s11] sm:$0x1]
    %v411 = vlaneseq
    %v412 = vshrl.u32 %v411, 7
    %v413 = vsub.s32 0, %v412
    %v414 = vrot.slane %v262, %v413
    %v422 = vunpack.c.l.b16 %v152
    %v423 = vunpack.c.h.b16 %v152
    %v424 = vunpack.c.l.b16 %v153
    %v425 = vunpack.c.h.b16 %v153
    %v426 = vunpack.c.l.b16 %v154
    %v427 = vunpack.c.h.b16 %v154
    %v428 = vunpack.c.l.b16 %v155
    %v429 = vunpack.c.h.b16 %v155
    %v430 = vunpack.c.l.b16 %v156
    %v431 = vunpack.c.h.b16 %v156
    %v432 = vunpack.c.l.b16 %v157
    %v433 = vunpack.c.h.b16 %v157
    %v434 = vpack.c.b16 %v428, %v422
    %v435 = vpack.c.b16 %v429, %v423
    %v436 = vpack.c.b16 %v430, %v424
    %v437 = vpack.c.b16 %v431, %v425
    %v438 = vpack.c.b16 %v432, %v426
    %v439 = vpack.c.b16 %v433, %v427
    %v542 = vunpack.c.l.b16 %v166
    %v543 = vunpack.c.l.b16 %v167
    %v544 = vunpack.c.l.b16 %v168
    %v545 = vunpack.c.l.b16 %v169
    %v546 = vunpack.c.l.b16 %v170
    %v547 = vunpack.c.l.b16 %v171
    %v548 = vunpack.c.l.b16 %v172
    %v549 = vunpack.c.l.b16 %v173
    %v550 = vunpack.c.l.b16 %v174
    %v551 = vunpack.c.l.b16 %v175
    %v552 = vunpack.c.l.b16 %v176
    %v553 = vunpack.c.l.b16 %v177
    %v554 = vunpack.c.l.b16 %v178
    %v555 = vunpack.c.l.b16 %v179
    %v556 = vunpack.c.l.b16 %v180
    %v557 = vunpack.c.l.b16 %v181
    %v558 = vunpack.c.l.b16 %v182
    %v559 = vunpack.c.l.b16 %v183
    %v560 = vunpack.c.l.b16 %v184
    %v561 = vunpack.c.l.b16 %v185
    %v562 = vunpack.c.l.b16 %v186
    %v563 = vunpack.c.l.b16 %v187
    %v564 = vunpack.c.l.b16 %v188
    %v565 = vunpack.c.l.b16 %v189
    %v566 = vunpack.c.l.b16 %v190
    %v567 = vunpack.c.l.b16 %v191
    %v568 = vunpack.c.l.b16 %v192
    %v569 = vunpack.c.l.b16 %v193
    %v570 = vunpack.c.l.b16 %v194
    %v571 = vunpack.c.l.b16 %v195
    %v572 = vunpack.c.l.b16 %v196
    %v573 = vunpack.c.l.b16 %v197
    %v574 = vunpack.c.l.b16 %v198
    %v575 = vunpack.c.l.b16 %v199
    %v576 = vunpack.c.l.b16 %v200
    %v577 = vunpack.c.l.b16 %v201
    %v578 = vunpack.c.l.b16 %v202
    %v579 = vunpack.c.l.b16 %v203
    %v580 = vunpack.c.l.b16 %v204
    %v581 = vunpack.c.l.b16 %v205
    %v582 = vunpack.c.l.b16 %v206
    %v583 = vunpack.c.l.b16 %v207
    %v584 = vunpack.c.l.b16 %v208
    %v585 = vunpack.c.l.b16 %v209
    %v586 = vunpack.c.l.b16 %v210
    %v587 = vunpack.c.l.b16 %v211
    %v588 = vunpack.c.l.b16 %v212
    %v589 = vunpack.c.l.b16 %v213
    %v590 = vunpack.c.l.b16 %v214
    %v591 = vunpack.c.l.b16 %v215
    %v592 = vunpack.c.l.b16 %v216
    %v593 = vunpack.c.l.b16 %v217
    %v594 = vunpack.c.l.b16 %v218
    %v595 = vunpack.c.l.b16 %v219
    %v596 = vunpack.c.l.b16 %v220
    %v597 = vunpack.c.l.b16 %v221
    %v598 = vunpack.c.l.b16 %v222
    %v599 = vunpack.c.l.b16 %v223
    %v600 = vunpack.c.l.b16 %v224
    %v601 = vunpack.c.l.b16 %v225
    %v602 = vunpack.c.l.b16 %v226
    %v603 = vunpack.c.l.b16 %v227
    %v604 = vunpack.c.l.b16 %v228
    %v605 = vunpack.c.l.b16 %v229
    %v606 = vunpack.c.l.b16 %v230
    %v607 = vunpack.c.l.b16 %v231
    %v608 = vunpack.c.l.b16 %v232
    %v609 = vunpack.c.l.b16 %v233
    %v610 = vunpack.c.l.b16 %v234
    %v611 = vunpack.c.l.b16 %v235
    %v612 = vunpack.c.l.b16 %v236
    %v613 = vunpack.c.l.b16 %v237
    %v614 = vunpack.c.l.b16 %v238
    %v615 = vunpack.c.l.b16 %v239
    %v616 = vunpack.c.l.b16 %v240
    %v617 = vunpack.c.l.b16 %v241
    %v618 = vunpack.c.l.b16 %v242
    %v619 = vunpack.c.l.b16 %v243
    %v620 = vunpack.c.l.b16 %v244
    %v621 = vunpack.c.l.b16 %v245
    %v622 = vunpack.c.l.b16 %v246
    %v623 = vunpack.c.l.b16 %v247
    %v624 = vunpack.c.l.b16 %v248
    %v625 = vunpack.c.l.b16 %v249
    %v626 = vunpack.c.l.b16 %v250
    %v627 = vunpack.c.l.b16 %v251
    %v628 = vunpack.c.l.b16 %v252
    %v629 = vunpack.c.l.b16 %v253
    %v630 = vunpack.c.l.b16 %v254
    %v631 = vunpack.c.l.b16 %v255
    %v632 = vunpack.c.l.b16 %v256
    %v633 = vunpack.c.l.b16 %v257
    %v634 = vunpack.c.l.b16 %v258
    %v635 = vunpack.c.l.b16 %v259
    %v636 = vunpack.c.l.b16 %v260
    %v637 = vunpack.c.l.b16 %v261
    %v638 = vpack.c.b16 %v543, %v542
    %v639 = vpack.c.b16 %v545, %v544
    %v640 = vpack.c.b16 %v547, %v546
    %v641 = vpack.c.b16 %v549, %v548
    %v642 = vpack.c.b16 %v551, %v550
    %v643 = vpack.c.b16 %v553, %v552
    %v644 = vpack.c.b16 %v555, %v554
    %v645 = vpack.c.b16 %v557, %v556
    %v646 = vpack.c.b16 %v559, %v558
    %v647 = vpack.c.b16 %v561, %v560
    %v648 = vpack.c.b16 %v563, %v562
    %v649 = vpack.c.b16 %v565, %v564
    %v650 = vpack.c.b16 %v567, %v566
    %v651 = vpack.c.b16 %v569, %v568
    %v652 = vpack.c.b16 %v571, %v570
    %v653 = vpack.c.b16 %v573, %v572
    %v654 = vpack.c.b16 %v575, %v574
    %v655 = vpack.c.b16 %v577, %v576
    %v656 = vpack.c.b16 %v579, %v578
    %v657 = vpack.c.b16 %v581, %v580
    %v658 = vpack.c.b16 %v583, %v582
    %v659 = vpack.c.b16 %v585, %v584
    %v660 = vpack.c.b16 %v587, %v586
    %v661 = vpack.c.b16 %v589, %v588
    %v662 = vpack.c.b16 %v591, %v590
    %v663 = vpack.c.b16 %v593, %v592
    %v664 = vpack.c.b16 %v595, %v594
    %v665 = vpack.c.b16 %v597, %v596
    %v666 = vpack.c.b16 %v599, %v598
    %v667 = vpack.c.b16 %v601, %v600
    %v668 = vpack.c.b16 %v603, %v602
    %v669 = vpack.c.b16 %v605, %v604
    %v670 = vpack.c.b16 %v607, %v606
    %v671 = vpack.c.b16 %v609, %v608
    %v672 = vpack.c.b16 %v611, %v610
    %v673 = vpack.c.b16 %v613, %v612
    %v674 = vpack.c.b16 %v615, %v614
    %v675 = vpack.c.b16 %v617, %v616
    %v676 = vpack.c.b16 %v619, %v618
    %v677 = vpack.c.b16 %v621, %v620
    %v678 = vpack.c.b16 %v623, %v622
    %v679 = vpack.c.b16 %v625, %v624
    %v680 = vpack.c.b16 %v627, %v626
    %v681 = vpack.c.b16 %v629, %v628
    %v682 = vpack.c.b16 %v631, %v630
    %v683 = vpack.c.b16 %v633, %v632
    %v684 = vpack.c.b16 %v635, %v634
    %v685 = vpack.c.b16 %v637, %v636
    %734 = vmatprep.subr.bf16.mxu0 0
    %735 = vmatpush1.bf16.msra.mxu0 %v638
    %736 = vmatprep.subr.bf16.mxu0 0
    %737 = vmatpush1.bf16.msra.mxu0 %v639
    %738 = vmatprep.subr.bf16.mxu0 0
    %739 = vmatpush1.bf16.msra.mxu0 %v640
    %740 = vmatprep.subr.bf16.mxu0 0
    %741 = vmatpush1.bf16.msra.mxu0 %v641
    %742 = vmatprep.subr.bf16.mxu0 0
    %743 = vmatpush1.bf16.msra.mxu0 %v642
    %744 = vmatprep.subr.bf16.mxu0 0
    %745 = vmatpush1.bf16.msra.mxu0 %v643
    %746 = vmatprep.subr.bf16.mxu0 0
    %747 = vmatpush1.bf16.msra.mxu0 %v644
    %748 = vmatprep.subr.bf16.mxu0 0
    %749 = vmatpush1.bf16.msra.mxu0 %v645
    %750 = vmatprep.subr.bf16.mxu0 0
    %751 = vmatpush1.bf16.msra.mxu0 %v646
    %752 = vmatprep.subr.bf16.mxu0 0
    %753 = vmatpush1.bf16.msra.mxu0 %v647
    %754 = vmatprep.subr.bf16.mxu0 0
    %755 = vmatpush1.bf16.msra.mxu0 %v648
    %756 = vmatprep.subr.bf16.mxu0 0
    %757 = vmatpush1.bf16.msra.mxu0 %v649
    %758 = vmatprep.subr.bf16.mxu0 0
    %759 = vmatpush1.bf16.msra.mxu0 %v650
    %760 = vmatprep.subr.bf16.mxu0 0
    %761 = vmatpush1.bf16.msra.mxu0 %v651
    %762 = vmatprep.subr.bf16.mxu0 0
    %763 = vmatpush1.bf16.msra.mxu0 %v652
    %764 = vmatprep.subr.bf16.mxu0 0
    %765 = vmatpush1.bf16.msra.mxu0 %v653
    %766 = vmatprep.mubr.bf16.mxu0 %v435
    %767 = vmatmul.mubr.bf16.gmra.mrb[0].mxu0 %v434
    %v768 = vpop.f32.mrb[0].mxu0
    %v769 = vadd.f32 %v414, %v768
    %v770 = vpop.f32.mrb[0].mxu0
    %v771 = vpop.f32.mrb[0].mxu0
    %v772 = vadd.f32 %v414, %v771
    %v773 = vpop.f32.mrb[0].mxu0
    %774 = vdwg.mxu0
    %775 = vmatprep.subr.bf16.mxu0 0
    %776 = vmatpush1.bf16.msra.mxu0 %v654
    %777 = vmatprep.subr.bf16.mxu0 0
    %778 = vmatpush1.bf16.msra.mxu0 %v655
    %779 = vmatprep.subr.bf16.mxu0 0
    %780 = vmatpush1.bf16.msra.mxu0 %v656
    %781 = vmatprep.subr.bf16.mxu0 0
    %782 = vmatpush1.bf16.msra.mxu0 %v657
    %783 = vmatprep.subr.bf16.mxu0 0
    %784 = vmatpush1.bf16.msra.mxu0 %v658
    %785 = vmatprep.subr.bf16.mxu0 0
    %786 = vmatpush1.bf16.msra.mxu0 %v659
    %787 = vmatprep.subr.bf16.mxu0 0
    %788 = vmatpush1.bf16.msra.mxu0 %v660
    %789 = vmatprep.subr.bf16.mxu0 0
    %790 = vmatpush1.bf16.msra.mxu0 %v661
    %791 = vmatprep.subr.bf16.mxu0 0
    %792 = vmatpush1.bf16.msra.mxu0 %v662
    %793 = vmatprep.subr.bf16.mxu0 0
    %794 = vmatpush1.bf16.msra.mxu0 %v663
    %795 = vmatprep.subr.bf16.mxu0 0
    %796 = vmatpush1.bf16.msra.mxu0 %v664
    %797 = vmatprep.subr.bf16.mxu0 0
    %798 = vmatpush1.bf16.msra.mxu0 %v665
    %799 = vmatprep.subr.bf16.mxu0 0
    %800 = vmatpush1.bf16.msra.mxu0 %v666
    %801 = vmatprep.subr.bf16.mxu0 0
    %802 = vmatpush1.bf16.msra.mxu0 %v667
    %803 = vmatprep.subr.bf16.mxu0 0
    %804 = vmatpush1.bf16.msra.mxu0 %v668
    %805 = vmatprep.subr.bf16.mxu0 0
    %806 = vmatpush1.bf16.msra.mxu0 %v669
    %807 = vmatprep.mubr.bf16.mxu0 %v437
    %808 = vmatmul.mubr.bf16.gmra.mrb[0].mxu0 %v436
    %v809 = vpop.f32.mrb[0].mxu0
    %v810 = vadd.f32 %v769, %v809
    %v811 = vpop.f32.mrb[0].mxu0
    %v812 = vpop.f32.mrb[0].mxu0
    %v813 = vadd.f32 %v772, %v812
    %v814 = vpop.f32.mrb[0].mxu0
    %815 = vdwg.mxu0
    %816 = vmatprep.subr.bf16.mxu0 0
    %817 = vmatpush1.bf16.msra.mxu0 %v670
    %818 = vmatprep.subr.bf16.mxu0 0
    %819 = vmatpush1.bf16.msra.mxu0 %v671
    %820 = vmatprep.subr.bf16.mxu0 0
    %821 = vmatpush1.bf16.msra.mxu0 %v672
    %822 = vmatprep.subr.bf16.mxu0 0
    %823 = vmatpush1.bf16.msra.mxu0 %v673
    %824 = vmatprep.subr.bf16.mxu0 0
    %825 = vmatpush1.bf16.msra.mxu0 %v674
    %826 = vmatprep.subr.bf16.mxu0 0
    %827 = vmatpush1.bf16.msra.mxu0 %v675
    %828 = vmatprep.subr.bf16.mxu0 0
    %829 = vmatpush1.bf16.msra.mxu0 %v676
    %830 = vmatprep.subr.bf16.mxu0 0
    %831 = vmatpush1.bf16.msra.mxu0 %v677
    %832 = vmatprep.subr.bf16.mxu0 0
    %833 = vmatpush1.bf16.msra.mxu0 %v678
    %834 = vmatprep.subr.bf16.mxu0 0
    %835 = vmatpush1.bf16.msra.mxu0 %v679
    %836 = vmatprep.subr.bf16.mxu0 0
    %837 = vmatpush1.bf16.msra.mxu0 %v680
    %838 = vmatprep.subr.bf16.mxu0 0
    %839 = vmatpush1.bf16.msra.mxu0 %v681
    %840 = vmatprep.subr.bf16.mxu0 0
    %841 = vmatpush1.bf16.msra.mxu0 %v682
    %842 = vmatprep.subr.bf16.mxu0 0
    %843 = vmatpush1.bf16.msra.mxu0 %v683
    %844 = vmatprep.subr.bf16.mxu0 0
    %845 = vmatpush1.bf16.msra.mxu0 %v684
    %846 = vmatprep.subr.bf16.mxu0 0
    %847 = vmatpush1.bf16.msra.mxu0 %v685
    %848 = vmatprep.mubr.bf16.mxu0 %v439
    %849 = vmatmul.mubr.bf16.gmra.mrb[0].mxu0 %v438
    %v850 = vpop.f32.mrb[0].mxu0
    %v851 = vadd.f32 %v810, %v850
    %v852 = vpop.f32.mrb[0].mxu0
    %v853 = vpop.f32.mrb[0].mxu0
    %v854 = vadd.f32 %v813, %v853
    %v855 = vpop.f32.mrb[0].mxu0
    %856 = vdwg.mxu0
    %v857 = vmax.f32 %v851, 0.0
    %v858 = vmax.f32 %v854, 0.0
    %v860 = vlaneseq
    %v861 = vshrl.u32 %v860, 7
    %v862 = vsub.s32 0, %v861
    %v863 = vrot.slane %v359, %v862
    %v871 = vunpack.c.l.b16 %v158
    %v872 = vunpack.c.h.b16 %v158
    %v873 = vunpack.c.l.b16 %v159
    %v874 = vunpack.c.h.b16 %v159
    %v875 = vunpack.c.l.b16 %v160
    %v876 = vunpack.c.h.b16 %v160
    %v877 = vunpack.c.l.b16 %v161
    %v878 = vunpack.c.h.b16 %v161
    %v879 = vunpack.c.l.b16 %v162
    %v880 = vunpack.c.h.b16 %v162
    %v881 = vunpack.c.l.b16 %v163
    %v882 = vunpack.c.h.b16 %v163
    %v883 = vpack.c.b16 %v877, %v871
    %v884 = vpack.c.b16 %v878, %v872
    %v885 = vpack.c.b16 %v879, %v873
    %v886 = vpack.c.b16 %v880, %v874
    %v887 = vpack.c.b16 %v881, %v875
    %v888 = vpack.c.b16 %v882, %v876
    %v991 = vunpack.c.l.b16 %v263
    %v992 = vunpack.c.l.b16 %v264
    %v993 = vunpack.c.l.b16 %v265
    %v994 = vunpack.c.l.b16 %v266
    %v995 = vunpack.c.l.b16 %v267
    %v996 = vunpack.c.l.b16 %v268
    %v997 = vunpack.c.l.b16 %v269
    %v998 = vunpack.c.l.b16 %v270
    %v999 = vunpack.c.l.b16 %v271
    %v1000 = vunpack.c.l.b16 %v272
    %v1001 = vunpack.c.l.b16 %v273
    %v1002 = vunpack.c.l.b16 %v274
    %v1003 = vunpack.c.l.b16 %v275
    %v1004 = vunpack.c.l.b16 %v276
    %v1005 = vunpack.c.l.b16 %v277
    %v1006 = vunpack.c.l.b16 %v278
    %v1007 = vunpack.c.l.b16 %v279
    %v1008 = vunpack.c.l.b16 %v280
    %v1009 = vunpack.c.l.b16 %v281
    %v1010 = vunpack.c.l.b16 %v282
    %v1011 = vunpack.c.l.b16 %v283
    %v1012 = vunpack.c.l.b16 %v284
    %v1013 = vunpack.c.l.b16 %v285
    %v1014 = vunpack.c.l.b16 %v286
    %v1015 = vunpack.c.l.b16 %v287
    %v1016 = vunpack.c.l.b16 %v288
    %v1017 = vunpack.c.l.b16 %v289
    %v1018 = vunpack.c.l.b16 %v290
    %v1019 = vunpack.c.l.b16 %v291
    %v1020 = vunpack.c.l.b16 %v292
    %v1021 = vunpack.c.l.b16 %v293
    %v1022 = vunpack.c.l.b16 %v294
    %v1023 = vunpack.c.l.b16 %v295
    %v1024 = vunpack.c.l.b16 %v296
    %v1025 = vunpack.c.l.b16 %v297
    %v1026 = vunpack.c.l.b16 %v298
    %v1027 = vunpack.c.l.b16 %v299
    %v1028 = vunpack.c.l.b16 %v300
    %v1029 = vunpack.c.l.b16 %v301
    %v1030 = vunpack.c.l.b16 %v302
    %v1031 = vunpack.c.l.b16 %v303
    %v1032 = vunpack.c.l.b16 %v304
    %v1033 = vunpack.c.l.b16 %v305
    %v1034 = vunpack.c.l.b16 %v306
    %v1035 = vunpack.c.l.b16 %v307
    %v1036 = vunpack.c.l.b16 %v308
    %v1037 = vunpack.c.l.b16 %v309
    %v1038 = vunpack.c.l.b16 %v310
    %v1039 = vunpack.c.l.b16 %v311
    %v1040 = vunpack.c.l.b16 %v312
    %v1041 = vunpack.c.l.b16 %v313
    %v1042 = vunpack.c.l.b16 %v314
    %v1043 = vunpack.c.l.b16 %v315
    %v1044 = vunpack.c.l.b16 %v316
    %v1045 = vunpack.c.l.b16 %v317
    %v1046 = vunpack.c.l.b16 %v318
    %v1047 = vunpack.c.l.b16 %v319
    %v1048 = vunpack.c.l.b16 %v320
    %v1049 = vunpack.c.l.b16 %v321
    %v1050 = vunpack.c.l.b16 %v322
    %v1051 = vunpack.c.l.b16 %v323
    %v1052 = vunpack.c.l.b16 %v324
    %v1053 = vunpack.c.l.b16 %v325
    %v1054 = vunpack.c.l.b16 %v326
    %v1055 = vunpack.c.l.b16 %v327
    %v1056 = vunpack.c.l.b16 %v328
    %v1057 = vunpack.c.l.b16 %v329
    %v1058 = vunpack.c.l.b16 %v330
    %v1059 = vunpack.c.l.b16 %v331
    %v1060 = vunpack.c.l.b16 %v332
    %v1061 = vunpack.c.l.b16 %v333
    %v1062 = vunpack.c.l.b16 %v334
    %v1063 = vunpack.c.l.b16 %v335
    %v1064 = vunpack.c.l.b16 %v336
    %v1065 = vunpack.c.l.b16 %v337
    %v1066 = vunpack.c.l.b16 %v338
    %v1067 = vunpack.c.l.b16 %v339
    %v1068 = vunpack.c.l.b16 %v340
    %v1069 = vunpack.c.l.b16 %v341
    %v1070 = vunpack.c.l.b16 %v342
    %v1071 = vunpack.c.l.b16 %v343
    %v1072 = vunpack.c.l.b16 %v344
    %v1073 = vunpack.c.l.b16 %v345
    %v1074 = vunpack.c.l.b16 %v346
    %v1075 = vunpack.c.l.b16 %v347
    %v1076 = vunpack.c.l.b16 %v348
    %v1077 = vunpack.c.l.b16 %v349
    %v1078 = vunpack.c.l.b16 %v350
    %v1079 = vunpack.c.l.b16 %v351
    %v1080 = vunpack.c.l.b16 %v352
    %v1081 = vunpack.c.l.b16 %v353
    %v1082 = vunpack.c.l.b16 %v354
    %v1083 = vunpack.c.l.b16 %v355
    %v1084 = vunpack.c.l.b16 %v356
    %v1085 = vunpack.c.l.b16 %v357
    %v1086 = vunpack.c.l.b16 %v358
    %v1087 = vpack.c.b16 %v992, %v991
    %v1088 = vpack.c.b16 %v994, %v993
    %v1089 = vpack.c.b16 %v996, %v995
    %v1090 = vpack.c.b16 %v998, %v997
    %v1091 = vpack.c.b16 %v1000, %v999
    %v1092 = vpack.c.b16 %v1002, %v1001
    %v1093 = vpack.c.b16 %v1004, %v1003
    %v1094 = vpack.c.b16 %v1006, %v1005
    %v1095 = vpack.c.b16 %v1008, %v1007
    %v1096 = vpack.c.b16 %v1010, %v1009
    %v1097 = vpack.c.b16 %v1012, %v1011
    %v1098 = vpack.c.b16 %v1014, %v1013
    %v1099 = vpack.c.b16 %v1016, %v1015
    %v1100 = vpack.c.b16 %v1018, %v1017
    %v1101 = vpack.c.b16 %v1020, %v1019
    %v1102 = vpack.c.b16 %v1022, %v1021
    %v1103 = vpack.c.b16 %v1024, %v1023
    %v1104 = vpack.c.b16 %v1026, %v1025
    %v1105 = vpack.c.b16 %v1028, %v1027
    %v1106 = vpack.c.b16 %v1030, %v1029
    %v1107 = vpack.c.b16 %v1032, %v1031
    %v1108 = vpack.c.b16 %v1034, %v1033
    %v1109 = vpack.c.b16 %v1036, %v1035
    %v1110 = vpack.c.b16 %v1038, %v1037
    %v1111 = vpack.c.b16 %v1040, %v1039
    %v1112 = vpack.c.b16 %v1042, %v1041
    %v1113 = vpack.c.b16 %v1044, %v1043
    %v1114 = vpack.c.b16 %v1046, %v1045
    %v1115 = vpack.c.b16 %v1048, %v1047
    %v1116 = vpack.c.b16 %v1050, %v1049
    %v1117 = vpack.c.b16 %v1052, %v1051
    %v1118 = vpack.c.b16 %v1054, %v1053
    %v1119 = vpack.c.b16 %v1056, %v1055
    %v1120 = vpack.c.b16 %v1058, %v1057
    %v1121 = vpack.c.b16 %v1060, %v1059
    %v1122 = vpack.c.b16 %v1062, %v1061
    %v1123 = vpack.c.b16 %v1064, %v1063
    %v1124 = vpack.c.b16 %v1066, %v1065
    %v1125 = vpack.c.b16 %v1068, %v1067
    %v1126 = vpack.c.b16 %v1070, %v1069
    %v1127 = vpack.c.b16 %v1072, %v1071
    %v1128 = vpack.c.b16 %v1074, %v1073
    %v1129 = vpack.c.b16 %v1076, %v1075
    %v1130 = vpack.c.b16 %v1078, %v1077
    %v1131 = vpack.c.b16 %v1080, %v1079
    %v1132 = vpack.c.b16 %v1082, %v1081
    %v1133 = vpack.c.b16 %v1084, %v1083
    %v1134 = vpack.c.b16 %v1086, %v1085
    %1183 = vmatprep.subr.bf16.mxu0 0
    %1184 = vmatpush1.bf16.msra.mxu0 %v1087
    %1185 = vmatprep.subr.bf16.mxu0 0
    %1186 = vmatpush1.bf16.msra.mxu0 %v1088
    %1187 = vmatprep.subr.bf16.mxu0 0
    %1188 = vmatpush1.bf16.msra.mxu0 %v1089
    %1189 = vmatprep.subr.bf16.mxu0 0
    %1190 = vmatpush1.bf16.msra.mxu0 %v1090
    %1191 = vmatprep.subr.bf16.mxu0 0
    %1192 = vmatpush1.bf16.msra.mxu0 %v1091
    %1193 = vmatprep.subr.bf16.mxu0 0
    %1194 = vmatpush1.bf16.msra.mxu0 %v1092
    %1195 = vmatprep.subr.bf16.mxu0 0
    %1196 = vmatpush1.bf16.msra.mxu0 %v1093
    %1197 = vmatprep.subr.bf16.mxu0 0
    %1198 = vmatpush1.bf16.msra.mxu0 %v1094
    %1199 = vmatprep.subr.bf16.mxu0 0
    %1200 = vmatpush1.bf16.msra.mxu0 %v1095
    %1201 = vmatprep.subr.bf16.mxu0 0
    %1202 = vmatpush1.bf16.msra.mxu0 %v1096
    %1203 = vmatprep.subr.bf16.mxu0 0
    %1204 = vmatpush1.bf16.msra.mxu0 %v1097
    %1205 = vmatprep.subr.bf16.mxu0 0
    %1206 = vmatpush1.bf16.msra.mxu0 %v1098
    %1207 = vmatprep.subr.bf16.mxu0 0
    %1208 = vmatpush1.bf16.msra.mxu0 %v1099
    %1209 = vmatprep.subr.bf16.mxu0 0
    %1210 = vmatpush1.bf16.msra.mxu0 %v1100
    %1211 = vmatprep.subr.bf16.mxu0 0
    %1212 = vmatpush1.bf16.msra.mxu0 %v1101
    %1213 = vmatprep.subr.bf16.mxu0 0
    %1214 = vmatpush1.bf16.msra.mxu0 %v1102
    %1215 = vmatprep.mubr.bf16.mxu0 %v884
    %1216 = vmatmul.mubr.bf16.gmra.mrb[0].mxu0 %v883
    %v1217 = vpop.f32.mrb[0].mxu0
    %v1218 = vadd.f32 %v863, %v1217
    %v1219 = vpop.f32.mrb[0].mxu0
    %v1220 = vpop.f32.mrb[0].mxu0
    %v1221 = vadd.f32 %v863, %v1220
    %v1222 = vpop.f32.mrb[0].mxu0
    %1223 = vdwg.mxu0
    %1224 = vmatprep.subr.bf16.mxu0 0
    %1225 = vmatpush1.bf16.msra.mxu0 %v1103
    %1226 = vmatprep.subr.bf16.mxu0 0
    %1227 = vmatpush1.bf16.msra.mxu0 %v1104
    %1228 = vmatprep.subr.bf16.mxu0 0
    %1229 = vmatpush1.bf16.msra.mxu0 %v1105
    %1230 = vmatprep.subr.bf16.mxu0 0
    %1231 = vmatpush1.bf16.msra.mxu0 %v1106
    %1232 = vmatprep.subr.bf16.mxu0 0
    %1233 = vmatpush1.bf16.msra.mxu0 %v1107
    %1234 = vmatprep.subr.bf16.mxu0 0
    %1235 = vmatpush1.bf16.msra.mxu0 %v1108
    %1236 = vmatprep.subr.bf16.mxu0 0
    %1237 = vmatpush1.bf16.msra.mxu0 %v1109
    %1238 = vmatprep.subr.bf16.mxu0 0
    %1239 = vmatpush1.bf16.msra.mxu0 %v1110
    %1240 = vmatprep.subr.bf16.mxu0 0
    %1241 = vmatpush1.bf16.msra.mxu0 %v1111
    %1242 = vmatprep.subr.bf16.mxu0 0
    %1243 = vmatpush1.bf16.msra.mxu0 %v1112
    %1244 = vmatprep.subr.bf16.mxu0 0
    %1245 = vmatpush1.bf16.msra.mxu0 %v1113
    %1246 = vmatprep.subr.bf16.mxu0 0
    %1247 = vmatpush1.bf16.msra.mxu0 %v1114
    %1248 = vmatprep.subr.bf16.mxu0 0
    %1249 = vmatpush1.bf16.msra.mxu0 %v1115
    %1250 = vmatprep.subr.bf16.mxu0 0
    %1251 = vmatpush1.bf16.msra.mxu0 %v1116
    %1252 = vmatprep.subr.bf16.mxu0 0
    %1253 = vmatpush1.bf16.msra.mxu0 %v1117
    %1254 = vmatprep.subr.bf16.mxu0 0
    %1255 = vmatpush1.bf16.msra.mxu0 %v1118
    %1256 = vmatprep.mubr.bf16.mxu0 %v886
    %1257 = vmatmul.mubr.bf16.gmra.mrb[0].mxu0 %v885
    %v1258 = vpop.f32.mrb[0].mxu0
    %v1259 = vadd.f32 %v1218, %v1258
    %v1260 = vpop.f32.mrb[0].mxu0
    %v1261 = vpop.f32.mrb[0].mxu0
    %v1262 = vadd.f32 %v1221, %v1261
    %v1263 = vpop.f32.mrb[0].mxu0
    %1264 = vdwg.mxu0
    %1265 = vmatprep.subr.bf16.mxu0 0
    %1266 = vmatpush1.bf16.msra.mxu0 %v1119
    %1267 = vmatprep.subr.bf16.mxu0 0
    %1268 = vmatpush1.bf16.msra.mxu0 %v1120
    %1269 = vmatprep.subr.bf16.mxu0 0
    %1270 = vmatpush1.bf16.msra.mxu0 %v1121
    %1271 = vmatprep.subr.bf16.mxu0 0
    %1272 = vmatpush1.bf16.msra.mxu0 %v1122
    %1273 = vmatprep.subr.bf16.mxu0 0
    %1274 = vmatpush1.bf16.msra.mxu0 %v1123
    %1275 = vmatprep.subr.bf16.mxu0 0
    %1276 = vmatpush1.bf16.msra.mxu0 %v1124
    %1277 = vmatprep.subr.bf16.mxu0 0
    %1278 = vmatpush1.bf16.msra.mxu0 %v1125
    %1279 = vmatprep.subr.bf16.mxu0 0
    %1280 = vmatpush1.bf16.msra.mxu0 %v1126
    %1281 = vmatprep.subr.bf16.mxu0 0
    %1282 = vmatpush1.bf16.msra.mxu0 %v1127
    %1283 = vmatprep.subr.bf16.mxu0 0
    %1284 = vmatpush1.bf16.msra.mxu0 %v1128
    %1285 = vmatprep.subr.bf16.mxu0 0
    %1286 = vmatpush1.bf16.msra.mxu0 %v1129
    %1287 = vmatprep.subr.bf16.mxu0 0
    %1288 = vmatpush1.bf16.msra.mxu0 %v1130
    %1289 = vmatprep.subr.bf16.mxu0 0
    %1290 = vmatpush1.bf16.msra.mxu0 %v1131
    %1291 = vmatprep.subr.bf16.mxu0 0
    %1292 = vmatpush1.bf16.msra.mxu0 %v1132
    %1293 = vmatprep.subr.bf16.mxu0 0
    %1294 = vmatpush1.bf16.msra.mxu0 %v1133
    %1295 = vmatprep.subr.bf16.mxu0 0
    %1296 = vmatpush1.bf16.msra.mxu0 %v1134
    %1297 = vmatprep.mubr.bf16.mxu0 %v888
    %1298 = vmatmul.mubr.bf16.gmra.mrb[0].mxu0 %v887
    %v1299 = vpop.f32.mrb[0].mxu0
    %v1300 = vadd.f32 %v1259, %v1299
    %v1301 = vpop.f32.mrb[0].mxu0
    %v1302 = vpop.f32.mrb[0].mxu0
    %v1303 = vadd.f32 %v1262, %v1302
    %v1304 = vpop.f32.mrb[0].mxu0
    %1305 = vdwg.mxu0
    %v1306 = vmax.f32 %v1300, 0.0
    %v1307 = vmax.f32 %v1303, 0.0
    %v1309 = vlaneseq
    %v1310 = vshrl.u32 %v1309, 7
    %v1311 = vsub.s32 0, %v1310
    %v1312 = vrot.slane %v376, %v1311
    %v1313 = vlaneseq
    %v1314 = vshrl.u32 %v1313, 7
    %v1315 = vsub.s32 1, %v1314
    %v1316 = vrot.slane %v376, %v1315
    %v1321 = vunpack.c.l.b16 %v164
    %v1322 = vunpack.c.l.b16 %v165
    %v1323 = vpack.c.b16 %v1322, %v1321
    %v1341 = vunpack.c.l.b16 %v360
    %v1342 = vunpack.c.h.b16 %v360
    %v1343 = vunpack.c.l.b16 %v361
    %v1344 = vunpack.c.h.b16 %v361
    %v1345 = vunpack.c.l.b16 %v362
    %v1346 = vunpack.c.h.b16 %v362
    %v1347 = vunpack.c.l.b16 %v363
    %v1348 = vunpack.c.h.b16 %v363
    %v1349 = vunpack.c.l.b16 %v364
    %v1350 = vunpack.c.h.b16 %v364
    %v1351 = vunpack.c.l.b16 %v365
    %v1352 = vunpack.c.h.b16 %v365
    %v1353 = vunpack.c.l.b16 %v366
    %v1354 = vunpack.c.h.b16 %v366
    %v1355 = vunpack.c.l.b16 %v367
    %v1356 = vunpack.c.h.b16 %v367
    %v1357 = vunpack.c.l.b16 %v368
    %v1358 = vunpack.c.h.b16 %v368
    %v1359 = vunpack.c.l.b16 %v369
    %v1360 = vunpack.c.h.b16 %v369
    %v1361 = vunpack.c.l.b16 %v370
    %v1362 = vunpack.c.h.b16 %v370
    %v1363 = vunpack.c.l.b16 %v371
    %v1364 = vunpack.c.h.b16 %v371
    %v1365 = vunpack.c.l.b16 %v372
    %v1366 = vunpack.c.h.b16 %v372
    %v1367 = vunpack.c.l.b16 %v373
    %v1368 = vunpack.c.h.b16 %v373
    %v1369 = vunpack.c.l.b16 %v374
    %v1370 = vunpack.c.h.b16 %v374
    %v1371 = vunpack.c.l.b16 %v375
    %v1372 = vunpack.c.h.b16 %v375
    %v1373 = vpack.c.b16 %v1343, %v1341
    %v1374 = vpack.c.b16 %v1344, %v1342
    %v1375 = vpack.c.b16 %v1347, %v1345
    %v1376 = vpack.c.b16 %v1348, %v1346
    %v1377 = vpack.c.b16 %v1351, %v1349
    %v1378 = vpack.c.b16 %v1352, %v1350
    %v1379 = vpack.c.b16 %v1355, %v1353
    %v1380 = vpack.c.b16 %v1356, %v1354
    %v1381 = vpack.c.b16 %v1359, %v1357
    %v1382 = vpack.c.b16 %v1360, %v1358
    %v1383 = vpack.c.b16 %v1363, %v1361
    %v1384 = vpack.c.b16 %v1364, %v1362
    %v1385 = vpack.c.b16 %v1367, %v1365
    %v1386 = vpack.c.b16 %v1368, %v1366
    %v1387 = vpack.c.b16 %v1371, %v1369
    %v1388 = vpack.c.b16 %v1372, %v1370
    %1405 = vmatprep.subr.bf16.mxu0 %v1374
    %1406 = vmatpush1.bf16.msra.mxu0 %v1373
    %1407 = vmatprep.subr.bf16.mxu0 %v1376
    %1408 = vmatpush1.bf16.msra.mxu0 %v1375
    %1409 = vmatprep.subr.bf16.mxu0 %v1378
    %1410 = vmatpush1.bf16.msra.mxu0 %v1377
    %1411 = vmatprep.subr.bf16.mxu0 %v1380
    %1412 = vmatpush1.bf16.msra.mxu0 %v1379
    %1413 = vmatprep.subr.bf16.mxu0 %v1382
    %1414 = vmatpush1.bf16.msra.mxu0 %v1381
    %1415 = vmatprep.subr.bf16.mxu0 %v1384
    %1416 = vmatpush1.bf16.msra.mxu0 %v1383
    %1417 = vmatprep.subr.bf16.mxu0 %v1386
    %1418 = vmatpush1.bf16.msra.mxu0 %v1385
    %1419 = vmatprep.subr.bf16.mxu0 %v1388
    %1420 = vmatpush1.bf16.msra.mxu0 %v1387
    %1421 = vmatprep.subr.bf16.mxu0 0
    %1422 = vmatpush1.bf16.msra.mxu0 0
    %1423 = vmatprep.subr.bf16.mxu0 0
    %1424 = vmatpush1.bf16.msra.mxu0 0
    %1425 = vmatprep.subr.bf16.mxu0 0
    %1426 = vmatpush1.bf16.msra.mxu0 0
    %1427 = vmatprep.subr.bf16.mxu0 0
    %1428 = vmatpush1.bf16.msra.mxu0 0
    %1429 = vmatprep.subr.bf16.mxu0 0
    %1430 = vmatpush1.bf16.msra.mxu0 0
    %1431 = vmatprep.subr.bf16.mxu0 0
    %1432 = vmatpush1.bf16.msra.mxu0 0
    %1433 = vmatprep.subr.bf16.mxu0 0
    %1434 = vmatpush1.bf16.msra.mxu0 0
    %1435 = vmatprep.subr.bf16.mxu0 0
    %1436 = vmatpush1.bf16.msra.mxu0 0
    %1437 = vmatprep.mubr.bf16.mxu0 0
    %1438 = vmatmul.mubr.bf16.gmra.mrb[0].mxu0 %v1323
    %v1439 = vpop.f32.mrb[0].mxu0
    %v1440 = vadd.f32 %v1312, %v1439
    %v1441 = vpop.f32.mrb[0].mxu0
    %v1442 = vadd.f32 %v1316, %v1441
    %v1443 = vpop.f32.mrb[0].mxu0
    %v1444 = vadd.f32 %v1312, %v1443
    %v1445 = vpop.f32.mrb[0].mxu0
    %v1446 = vadd.f32 %v1316, %v1445
    %1447 = vdwg.mxu0
    %v1448 = vadd.f32 %v1440, 1.0
    %v1449 = vadd.f32 %v1444, 1.0
    %v1450 = vmul.f32 %v857, %v1448
    %v1451 = vmul.f32 %v858, %v1449
    %v1452 = vadd.f32 %v1450, %v1442
    %v1453 = vadd.f32 %v1451, %v1446
    %v1454 = vpack.c.bf16 %v1453, %v1452
    %v1455 = vpack.c.bf16 %v1307, %v1306
    %v1472 = vunpack.c.l.b16 %v393
    %v1473 = vunpack.c.l.b16 %v394
    %v1474 = vunpack.c.l.b16 %v395
    %v1475 = vunpack.c.l.b16 %v396
    %v1476 = vunpack.c.l.b16 %v397
    %v1477 = vunpack.c.l.b16 %v398
    %v1478 = vunpack.c.l.b16 %v399
    %v1479 = vunpack.c.l.b16 %v400
    %v1480 = vunpack.c.l.b16 %v401
    %v1481 = vunpack.c.l.b16 %v402
    %v1482 = vunpack.c.l.b16 %v403
    %v1483 = vunpack.c.l.b16 %v404
    %v1484 = vunpack.c.l.b16 %v405
    %v1485 = vunpack.c.l.b16 %v406
    %v1486 = vunpack.c.l.b16 %v407
    %v1487 = vunpack.c.l.b16 %v408
    %v1488 = vpack.c.b16 %v1473, %v1472
    %v1489 = vpack.c.b16 %v1475, %v1474
    %v1490 = vpack.c.b16 %v1477, %v1476
    %v1491 = vpack.c.b16 %v1479, %v1478
    %v1492 = vpack.c.b16 %v1481, %v1480
    %v1493 = vpack.c.b16 %v1483, %v1482
    %v1494 = vpack.c.b16 %v1485, %v1484
    %v1495 = vpack.c.b16 %v1487, %v1486
    %1504 = vmatprep.subr.bf16.mxu0 0
    %1505 = vmatpush1.bf16.msra.mxu0 %v1488
    %1506 = vmatprep.subr.bf16.mxu0 0
    %1507 = vmatpush1.bf16.msra.mxu0 %v1489
    %1508 = vmatprep.subr.bf16.mxu0 0
    %1509 = vmatpush1.bf16.msra.mxu0 %v1490
    %1510 = vmatprep.subr.bf16.mxu0 0
    %1511 = vmatpush1.bf16.msra.mxu0 %v1491
    %1512 = vmatprep.subr.bf16.mxu0 0
    %1513 = vmatpush1.bf16.msra.mxu0 %v1492
    %1514 = vmatprep.subr.bf16.mxu0 0
    %1515 = vmatpush1.bf16.msra.mxu0 %v1493
    %1516 = vmatprep.subr.bf16.mxu0 0
    %1517 = vmatpush1.bf16.msra.mxu0 %v1494
    %1518 = vmatprep.subr.bf16.mxu0 0
    %1519 = vmatpush1.bf16.msra.mxu0 %v1495
    %1520 = vmatprep.subr.bf16.mxu0 0
    %1521 = vmatpush1.bf16.msra.mxu0 0
    %1522 = vmatprep.subr.bf16.mxu0 0
    %1523 = vmatpush1.bf16.msra.mxu0 0
    %1524 = vmatprep.subr.bf16.mxu0 0
    %1525 = vmatpush1.bf16.msra.mxu0 0
    %1526 = vmatprep.subr.bf16.mxu0 0
    %1527 = vmatpush1.bf16.msra.mxu0 0
    %1528 = vmatprep.subr.bf16.mxu0 0
    %1529 = vmatpush1.bf16.msra.mxu0 0
    %1530 = vmatprep.subr.bf16.mxu0 0
    %1531 = vmatpush1.bf16.msra.mxu0 0
    %1532 = vmatprep.subr.bf16.mxu0 0
    %1533 = vmatpush1.bf16.msra.mxu0 0
    %1534 = vmatprep.subr.bf16.mxu0 0
    %1535 = vmatpush1.bf16.msra.mxu0 0
    %1536 = vmatprep.mubr.bf16.mxu0 0
    %1537 = vmatmul.mubr.bf16.gmra.mrb[0].mxu0 %v1455
    %v1538 = vpop.f32.mrb[0].mxu0
    %v1539 = vadd.f32 0.0, %v1538
    %v1540 = vpop.f32.mrb[0].mxu0
    %v1541 = vpop.f32.mrb[0].mxu0
    %v1542 = vadd.f32 0.0, %v1541
    %v1543 = vpop.f32.mrb[0].mxu0
    %1544 = vdwg.mxu0
    %v1561 = vunpack.c.l.b16 %v377
    %v1562 = vunpack.c.l.b16 %v378
    %v1563 = vunpack.c.l.b16 %v379
    %v1564 = vunpack.c.l.b16 %v380
    %v1565 = vunpack.c.l.b16 %v381
    %v1566 = vunpack.c.l.b16 %v382
    %v1567 = vunpack.c.l.b16 %v383
    %v1568 = vunpack.c.l.b16 %v384
    %v1569 = vunpack.c.l.b16 %v385
    %v1570 = vunpack.c.l.b16 %v386
    %v1571 = vunpack.c.l.b16 %v387
    %v1572 = vunpack.c.l.b16 %v388
    %v1573 = vunpack.c.l.b16 %v389
    %v1574 = vunpack.c.l.b16 %v390
    %v1575 = vunpack.c.l.b16 %v391
    %v1576 = vunpack.c.l.b16 %v392
    %v1577 = vpack.c.b16 %v1562, %v1561
    %v1578 = vpack.c.b16 %v1564, %v1563
    %v1579 = vpack.c.b16 %v1566, %v1565
    %v1580 = vpack.c.b16 %v1568, %v1567
    %v1581 = vpack.c.b16 %v1570, %v1569
    %v1582 = vpack.c.b16 %v1572, %v1571
    %v1583 = vpack.c.b16 %v1574, %v1573
    %v1584 = vpack.c.b16 %v1576, %v1575
    %1593 = vmatprep.subr.bf16.mxu0 0
    %1594 = vmatpush1.bf16.msra.mxu0 %v1577
    %1595 = vmatprep.subr.bf16.mxu0 0
    %1596 = vmatpush1.bf16.msra.mxu0 %v1578
    %1597 = vmatprep.subr.bf16.mxu0 0
    %1598 = vmatpush1.bf16.msra.mxu0 %v1579
    %1599 = vmatprep.subr.bf16.mxu0 0
    %1600 = vmatpush1.bf16.msra.mxu0 %v1580
    %1601 = vmatprep.subr.bf16.mxu0 0
    %1602 = vmatpush1.bf16.msra.mxu0 %v1581
    %1603 = vmatprep.subr.bf16.mxu0 0
    %1604 = vmatpush1.bf16.msra.mxu0 %v1582
    %1605 = vmatprep.subr.bf16.mxu0 0
    %1606 = vmatpush1.bf16.msra.mxu0 %v1583
    %1607 = vmatprep.subr.bf16.mxu0 0
    %1608 = vmatpush1.bf16.msra.mxu0 %v1584
    %1609 = vmatprep.subr.bf16.mxu0 0
    %1610 = vmatpush1.bf16.msra.mxu0 0
    %1611 = vmatprep.subr.bf16.mxu0 0
    %1612 = vmatpush1.bf16.msra.mxu0 0
    %1613 = vmatprep.subr.bf16.mxu0 0
    %1614 = vmatpush1.bf16.msra.mxu0 0
    %1615 = vmatprep.subr.bf16.mxu0 0
    %1616 = vmatpush1.bf16.msra.mxu0 0
    %1617 = vmatprep.subr.bf16.mxu0 0
    %1618 = vmatpush1.bf16.msra.mxu0 0
    %1619 = vmatprep.subr.bf16.mxu0 0
    %1620 = vmatpush1.bf16.msra.mxu0 0
    %1621 = vmatprep.subr.bf16.mxu0 0
    %1622 = vmatpush1.bf16.msra.mxu0 0
    %1623 = vmatprep.subr.bf16.mxu0 0
    %1624 = vmatpush1.bf16.msra.mxu0 0
    %1625 = vmatprep.mubr.bf16.mxu0 0
    %1626 = vmatmul.mubr.bf16.gmra.mrb[0].mxu0 %v1454
    %v1627 = vpop.f32.mrb[0].mxu0
    %v1628 = vadd.f32 %v1539, %v1627
    %v1629 = vpop.f32.mrb[0].mxu0
    %v1630 = vpop.f32.mrb[0].mxu0
    %v1631 = vadd.f32 %v1542, %v1630
    %v1632 = vpop.f32.mrb[0].mxu0
    %1633 = vdwg.mxu0
    %v1635 = vlaneseq
    %v1636 = vshrl.u32 %v1635, 7
    %v1637 = vsub.s32 0, %v1636
    %v1638 = vrot.slane %v409, %v1637
    %v1640 = vadd.f32 %v1628, %v1638
    %v1641 = vadd.f32 %v1631, %v1638
    %v1642 = vmax.f32 %v1640, 0.0
    %v1643 = vmax.f32 %v1641, 0.0
    %1644 = vst [vmem:[#allocation16] sm:$0xff] %v1642
    %1645 = vst [vmem:[#allocation16 + $0x8] sm:$0xff] %v1643
    // Predicated region
    $region82: #{tpu_custom_call.1} parent=1 // pred_check
      _
    $region83: #{tpu_custom_call.1} parent=1 // pred_check_branch
      %1647 = sbr.rel (0) target = $region85
    $region84: #{tpu_custom_call.1} parent=1 // pred_region
      %s1649 = ssub.s32 256, 256
      %1650 = vsyncadd [#allocation4], %s1649
      %s1651 = sshll.u32 [#allocation16], 4
      %s1652 = int_to_ptr.vmem [resolvable:$true] %s1651
      %1657 = dma.vmem_to_hbm [thread:$0]  %s1652, 256, %s12, [#allocation4], 128, 128, 8
    $region85: #{tpu_custom_call.1} parent=1 // pred_fallthru
      _
    // Predicated region
    $region86: #{tpu_custom_call.1} parent=1 // pred_check
      _
    $region87: #{tpu_custom_call.1} parent=1 // pred_check_branch
      %1659 = sbr.rel (0) target = $region89
    $region88: #{tpu_custom_call.1} parent=1 // pred_region
      %1660 = dma.done [#allocation4], 256
    $region89: #{tpu_custom_call.1} parent=1 // pred_fallthru
      _
    %1661 = vsyncpa [#allocation3], 1
    %1662 = vsyncpa [#allocation6], 1
    %1663 = vsyncpa [#allocation9], 1
    %1664 = vsyncpa [#allocation12], 1
    %1665 = vsyncpa [#allocation15], 1
    %1666 = vsyncpa [#allocation4], 1

</llo_original>
